<compile_context>
chip_gen: v6e
topology: v6e:2x2x1
jax: 0.10.0
libtpu: 0.0.40
codegen_flags: <defaults>
</compile_context>

<pallas_src>
import functools

import jax
import jax.numpy as jnp
from jax.experimental import pallas as pl
from jax.experimental.pallas import tpu as pltpu

NEG_SLOPE = 0.1   # LeakyReLU(negative_slope=0.1)
EPS = 1e-5        # InstanceNorm2d default eps


# ---------------------------------------------------------------------------
# Kernel
# ---------------------------------------------------------------------------
def _inorm_lrelu(a):
    """InstanceNorm2d(affine=False) + LeakyReLU(0.1) on a (C, H*W) fp32 tile."""
    mean = jnp.mean(a, axis=1, keepdims=True)
    cen = a - mean
    var = jnp.mean(cen * cen, axis=1, keepdims=True)
    y = cen * jax.lax.rsqrt(var + EPS)
    return jnp.where(y >= 0, y, NEG_SLOPE * y)


def _rb2_kernel(x_ref, w1_ref, w2_ref, w3_ref, wa1a_ref, wa1b_ref, wa1c_ref,
                wa2_ref, o_ref, pad_ref, col_ref, *, H, W, g, off):
    """Fused RB2 for one sample, channel-major layout (C, H*W).

    x_ref          : (1, Cin, HW)
    w{1,2,3}_ref   : (Cout_i, 9*Cin_i)   im2col-ordered 3x3 weights
    wa1{a,b,c}_ref : (Cout, g/2g/3g)     ac1 1x1 weight split along the concat
    wa2_ref        : (Cout, Cin)         ac2 1x1 weight
    o_ref          : (1, Cout, HW)
    pad_ref        : (Cmax, HW + 2*off)  flat, zero-haloed activation scratch
    col_ref        : (9*Cmax, HW)        im2col scratch
    """
    HW = H * W
    cin = x_ref.shape[1]

    # Lane-position masks guarding the horizontal (dx = -1 / +1) row wrap of
    # flat-HW shifts.  Hoisted: computed once, reused by every tap / conv.
    wpos = jax.lax.broadcasted_iota(jnp.int32, (1, HW), 1) % W
    m_left = wpos >= 1          # source column (w - 1) is in-bounds
    m_right = wpos <= W - 2     # source column (w + 1) is in-bounds

    # Zero the halo scratch: only the halo columns are ever read as zeros, the
    # interior is overwritten by every conv.  Done per grid step so each
    # megacore's private scratch is initialized.
    pad_ref[...] = jnp.zeros(pad_ref.shape, pad_ref.dtype)

    def conv3x3(inp, c_in, w_ref):
        """3x3 / stride 1 / pad 1 conv as ONE im2col matmul (K = 9*c_in)."""
        # Lane-aligned interior write; out-of-image reads land in the zero halo.
        pad_ref[0:c_in, off:off + HW] = inp
        for ky in range(3):
            for kx in range(3):
                t = ky * 3 + kx
                s = (ky - 1) * W + (kx - 1)          # flat spatial shift
                xs = pad_ref[0:c_in, off + s:off + s + HW]
                if kx == 0:
                    xs = jnp.where(m_left, xs, 0.0)
                elif kx == 2:
                    xs = jnp.where(m_right, xs, 0.0)
                col_ref[t * c_in:(t + 1) * c_in, :] = xs
        return jnp.dot(w_ref[...], col_ref[0:9 * c_in, :],
                       preferred_element_type=jnp.float32)

    x = x_ref[0]                                         # (Cin, HW)
    x1 = _inorm_lrelu(conv3x3(x, cin, w1_ref))           # (g,  HW)
    x2 = _inorm_lrelu(conv3x3(x1, g, w2_ref))            # (2g, HW)
    x3 = _inorm_lrelu(conv3x3(x2, 2 * g, w3_ref))        # (3g, HW)

    # ac1 over concat([x1, x2, x3]) without materializing the concat.
    a1 = (jnp.dot(wa1a_ref[...], x1, preferred_element_type=jnp.float32)
          + jnp.dot(wa1b_ref[...], x2, preferred_element_type=jnp.float32)
          + jnp.dot(wa1c_ref[...], x3, preferred_element_type=jnp.float32))
    a2 = jnp.dot(wa2_ref[...], x, preferred_element_type=jnp.float32)

    o_ref[0] = _inorm_lrelu(a1) + _inorm_lrelu(a2)       # lane-dense store


# ---------------------------------------------------------------------------
# Wrapper
# ---------------------------------------------------------------------------
def _conv3x3_to_colmajor(w_oihw):
    """(Cout, Cin, 3, 3) OIHW -> (Cout, 9*Cin), column = (ky*3+kx)*Cin + ci."""
    co, ci, kh, kw = w_oihw.shape
    return jnp.transpose(w_oihw, (0, 2, 3, 1)).reshape(co, kh * kw * ci)


def rb2_forward(x_nchw, params):
    """RB2 forward.  Input/output are PyTorch-style NCHW float32."""
    N, cin, H, W = x_nchw.shape
    g = cin // 2
    cout = params["ac1_w"].shape[0]
    HW = H * W
    off = ((W + 1 + 127) // 128) * 128       # 128-aligned interior offset
    cmax = max(cin, 2 * g)

    x3d = x_nchw.reshape(N, cin, HW)
    w1 = _conv3x3_to_colmajor(params["c1_w"])
    w2 = _conv3x3_to_colmajor(params["c2_w"])
    w3 = _conv3x3_to_colmajor(params["c3_w"])
    wa1 = params["ac1_w"].reshape(cout, 6 * g)
    wa1a, wa1b, wa1c = wa1[:, 0:g], wa1[:, g:3 * g], wa1[:, 3 * g:6 * g]
    wa2 = params["ac2_w"].reshape(cout, cin)
    # Conv biases are intentionally not passed: InstanceNorm2d(affine=False)
    # cancels a per-channel constant exactly.

    kern = functools.partial(_rb2_kernel, H=H, W=W, g=g, off=off)
    out3d = pl.pallas_call(
        kern,
        out_shape=jax.ShapeDtypeStruct((N, cout, HW), jnp.float32),
        grid=(N,),
        in_specs=[
            pl.BlockSpec((1, cin, HW), lambda n: (n, 0, 0)),
            pl.BlockSpec(w1.shape, lambda n: (0, 0)),
            pl.BlockSpec(w2.shape, lambda n: (0, 0)),
            pl.BlockSpec(w3.shape, lambda n: (0, 0)),
            pl.BlockSpec(wa1a.shape, lambda n: (0, 0)),
            pl.BlockSpec(wa1b.shape, lambda n: (0, 0)),
            pl.BlockSpec(wa1c.shape, lambda n: (0, 0)),
            pl.BlockSpec(wa2.shape, lambda n: (0, 0)),
        ],
        out_specs=pl.BlockSpec((1, cout, HW), lambda n: (n, 0, 0)),
        scratch_shapes=[
            pltpu.VMEM((cmax, HW + 2 * off), jnp.float32),   # zero-haloed act
            pltpu.VMEM((9 * cmax, HW), jnp.float32),         # im2col buffer
        ],
        compiler_params=pltpu.CompilerParams(
            dimension_semantics=("parallel",)),
    )(x3d, w1, w2, w3, wa1a, wa1b, wa1c, wa2)
    return out3d.reshape(N, cout, H, W)


# ---------------------------------------------------------------------------
# Pure-JAX reference (for correctness check), kept faithful incl. biases
# ---------------------------------------------------------------------------
def _ref_basic_conv(x, w, b, padding):
    y = jax.lax.conv_general_dilated(
        x, w, window_strides=(1, 1),
        padding=((padding, padding), (padding, padding)),
        dimension_numbers=("NCHW", "OIHW", "NCHW"),
        precision=jax.lax.Precision.HIGHEST)
    y = y + b[None, :, None, None]
    mean = jnp.mean(y, axis=(2, 3), keepdims=True)
    var = jnp.mean((y - mean) ** 2, axis=(2, 3), keepdims=True)
    y = (y - mean) * jax.lax.rsqrt(var + EPS)
    return jnp.where(y >= 0, y, NEG_SLOPE * y)


def _ref_rb2(x, params):
    x1 = _ref_basic_conv(x, params["c1_w"], params["c1_b"], 1)
    x2 = _ref_basic_conv(x1, params["c2_w"], params["c2_b"], 1)
    x3 = _ref_basic_conv(x2, params["c3_w"], params["c3_b"], 1)
    cat = jnp.concatenate([x1, x2, x3], axis=1)
    y1 = _ref_basic_conv(cat, params["ac1_w"], params["ac1_b"], 0)
    y2 = _ref_basic_conv(x, params["ac2_w"], params["ac2_b"], 0)
    return y1 + y2


# ---------------------------------------------------------------------------
# Main
# ---------------------------------------------------------------------------
def _init_params(key, in_channels, out_channels):
    """Deterministic synthetic parameters in PyTorch OIHW layout."""
    g = in_channels // 2
    shapes = {
        "c1_w": (g, in_channels, 3, 3),              "c1_b": (g,),
        "c2_w": (2 * g, g, 3, 3),                    "c2_b": (2 * g,),
        "c3_w": (3 * g, 2 * g, 3, 3),                "c3_b": (3 * g,),
        "ac1_w": (out_channels, 6 * g, 1, 1),        "ac1_b": (out_channels,),
        "ac2_w": (out_channels, in_channels, 1, 1),  "ac2_b": (out_channels,),
    }
    params = {}
    for name, shape in sorted(shapes.items()):
        key, sub = jax.random.split(key)
        scale = 0.3 if name.endswith("_w") else 0.05
        params[name] = scale * jax.random.normal(sub, shape, dtype=jnp.float32)
    return params


if __name__ == "__main__":
    N, C_IN, C_OUT, H, W = 2, 4, 8, 16, 16

    key = jax.random.PRNGKey(0)
    k_x, k_p = jax.random.split(key)
    x = jax.random.normal(k_x, (N, C_IN, H, W), dtype=jnp.float32)
    params = _init_params(k_p, C_IN, C_OUT)

    out = jax.block_until_ready(jax.jit(rb2_forward)(x, params))
    ref = jax.block_until_ready(_ref_rb2(x, params))

    assert out.shape == (N, C_OUT, H, W), out.shape
    assert bool(jnp.all(jnp.isfinite(out)))
    max_err = float(jnp.max(jnp.abs(out - ref)))
    assert bool(jnp.allclose(out, ref, atol=1e-2, rtol=1e-2)), max_err

    print("KERNEL_OK")
</pallas_src>

<mosaic_0001>
module attributes {stable_mosaic.version = 11 : i64} {
  func.func @_rb2_kernel(%arg0: i32, %arg1: memref<1x4x256xf32, #tpu.memory_space<vmem>>, %arg2: memref<2x36xf32, #tpu.memory_space<vmem>>, %arg3: memref<4x18xf32, #tpu.memory_space<vmem>>, %arg4: memref<6x36xf32, #tpu.memory_space<vmem>>, %arg5: memref<8x2xf32, #tpu.memory_space<vmem>>, %arg6: memref<8x4xf32, #tpu.memory_space<vmem>>, %arg7: memref<8x6xf32, #tpu.memory_space<vmem>>, %arg8: memref<8x4xf32, #tpu.memory_space<vmem>>, %arg9: memref<1x8x256xf32, #tpu.memory_space<vmem>>, %arg10: memref<4x512xf32, #tpu.memory_space<vmem>>, %arg11: memref<36x256xf32, #tpu.memory_space<vmem>>) attributes {dimension_semantics = [#tpu.dimension_semantics<parallel>], iteration_bounds = array<i64: 2>, scalar_prefetch = 0 : i64, scratch_operands = 2 : i64, tpu.core_type = #tpu.core_type<tc>, window_params = [{transform_indices = @transform_0, window_bounds = array<i64: 1, 4, 256>}, {pipeline_mode = #tpu.pipeline_mode<synchronous>, transform_indices = @transform_1, window_bounds = array<i64: 2, 36>}, {pipeline_mode = #tpu.pipeline_mode<synchronous>, transform_indices = @transform_2, window_bounds = array<i64: 4, 18>}, {pipeline_mode = #tpu.pipeline_mode<synchronous>, transform_indices = @transform_3, window_bounds = array<i64: 6, 36>}, {pipeline_mode = #tpu.pipeline_mode<synchronous>, transform_indices = @transform_4, window_bounds = array<i64: 8, 2>}, {pipeline_mode = #tpu.pipeline_mode<synchronous>, transform_indices = @transform_5, window_bounds = array<i64: 8, 4>}, {pipeline_mode = #tpu.pipeline_mode<synchronous>, transform_indices = @transform_6, window_bounds = array<i64: 8, 6>}, {pipeline_mode = #tpu.pipeline_mode<synchronous>, transform_indices = @transform_7, window_bounds = array<i64: 8, 4>}, {transform_indices = @transform_8, window_bounds = array<i64: 1, 8, 256>}]} {
    %0 = tpu.iota {dimensions = array<i32: 1>} : vector<1x256xi32>
    %c16_i32 = arith.constant 16 : i32
    %c0_i32 = arith.constant 0 : i32
    %1 = arith.cmpi eq, %c16_i32, %c0_i32 : i32
    %c1_i32 = arith.constant 1 : i32
    %2 = arith.select %1, %c1_i32, %c16_i32 : i32
    %3 = vector.broadcast %2 : i32 to vector<1x256xi32>
    %4 = arith.remsi %0, %3 : vector<1x256xi32>
    %c0_i32_0 = arith.constant 0 : i32
    %5 = vector.broadcast %c0_i32_0 : i32 to vector<1x256xi32>
    %6 = arith.cmpi ne, %4, %5 : vector<1x256xi32>
    %c0_i32_1 = arith.constant 0 : i32
    %7 = vector.broadcast %c0_i32_1 : i32 to vector<1x256xi32>
    %8 = arith.cmpi slt, %4, %7 : vector<1x256xi32>
    %c0_i32_2 = arith.constant 0 : i32
    %9 = arith.cmpi slt, %2, %c0_i32_2 : i32
    %10 = vector.broadcast %9 : i1 to vector<1x256xi1>
    %11 = vector.broadcast %10 : vector<1x256xi1> to vector<1x256xi1>
    %12 = arith.xori %8, %11 : vector<1x256xi1>
    %13 = arith.andi %12, %6 : vector<1x256xi1>
    %14 = vector.broadcast %2 : i32 to vector<1x256xi32>
    %15 = arith.addi %4, %14 : vector<1x256xi32>
    %16 = arith.select %13, %15, %4 : vector<1x256xi1>, vector<1x256xi32>
    %c1_i32_3 = arith.constant 1 : i32
    %17 = vector.broadcast %c1_i32_3 : i32 to vector<1x256xi32>
    %18 = arith.cmpi sge, %16, %17 : vector<1x256xi32>
    %c14_i32 = arith.constant 14 : i32
    %19 = vector.broadcast %c14_i32 : i32 to vector<1x256xi32>
    %20 = arith.cmpi sle, %16, %19 : vector<1x256xi32>
    %cst = arith.constant 0.000000e+00 : f32
    %21 = vector.broadcast %cst : f32 to vector<4x512xf32>
    %c0 = arith.constant 0 : index
    %c0_4 = arith.constant 0 : index
    %22 = vector.load %arg10[%c0, %c0_4] : memref<4x512xf32, #tpu.memory_space<vmem>>, vector<4x512xf32>
    tpu.vector_store %arg10[%c0, %c0_4], %21 {strides = array<i32>} : memref<4x512xf32, #tpu.memory_space<vmem>>, vector<4x512xf32>,
    %c0_5 = arith.constant 0 : index
    %c0_6 = arith.constant 0 : index
    %c0_7 = arith.constant 0 : index
    %23 = vector.load %arg1[%c0_5, %c0_6, %c0_7] : memref<1x4x256xf32, #tpu.memory_space<vmem>>, vector<1x4x256xf32>
    %24 = vector.shape_cast %23 : vector<1x4x256xf32> to vector<4x256xf32>
    %c0_8 = arith.constant 0 : index
    %c128 = arith.constant 128 : index
    %25 = vector.load %arg10[%c0_8, %c128] : memref<4x512xf32, #tpu.memory_space<vmem>>, vector<4x256xf32>
    tpu.vector_store %arg10[%c0_8, %c128], %24 {strides = array<i32>} : memref<4x512xf32, #tpu.memory_space<vmem>>, vector<4x256xf32>,
    %c0_9 = arith.constant 0 : index
    %c111 = arith.constant 111 : index
    %26 = vector.load %arg10[%c0_9, %c111] : memref<4x512xf32, #tpu.memory_space<vmem>>, vector<4x256xf32>
    %cst_10 = arith.constant 0.000000e+00 : f32
    %27 = vector.shape_cast %18 : vector<1x256xi1> to vector<1x256xi1>
    %28 = vector.broadcast %27 : vector<1x256xi1> to vector<4x256xi1>
    %29 = vector.broadcast %cst_10 : f32 to vector<4x256xf32>
    %30 = arith.select %28, %26, %29 : vector<4x256xi1>, vector<4x256xf32>
    %c0_11 = arith.constant 0 : index
    %c0_12 = arith.constant 0 : index
    %31 = vector.load %arg11[%c0_11, %c0_12] : memref<36x256xf32, #tpu.memory_space<vmem>>, vector<4x256xf32>
    tpu.vector_store %arg11[%c0_11, %c0_12], %30 {strides = array<i32>} : memref<36x256xf32, #tpu.memory_space<vmem>>, vector<4x256xf32>,
    %c0_13 = arith.constant 0 : index
    %c112 = arith.constant 112 : index
    %32 = vector.load %arg10[%c0_13, %c112] : memref<4x512xf32, #tpu.memory_space<vmem>>, vector<4x256xf32>
    %c4 = arith.constant 4 : index
    %c0_14 = arith.constant 0 : index
    %33 = vector.load %arg11[%c4, %c0_14] : memref<36x256xf32, #tpu.memory_space<vmem>>, vector<4x256xf32>
    tpu.vector_store %arg11[%c4, %c0_14], %32 {strides = array<i32>} : memref<36x256xf32, #tpu.memory_space<vmem>>, vector<4x256xf32>,
    %c0_15 = arith.constant 0 : index
    %c113 = arith.constant 113 : index
    %34 = vector.load %arg10[%c0_15, %c113] : memref<4x512xf32, #tpu.memory_space<vmem>>, vector<4x256xf32>
    %cst_16 = arith.constant 0.000000e+00 : f32
    %35 = vector.shape_cast %20 : vector<1x256xi1> to vector<1x256xi1>
    %36 = vector.broadcast %35 : vector<1x256xi1> to vector<4x256xi1>
    %37 = vector.broadcast %cst_16 : f32 to vector<4x256xf32>
    %38 = arith.select %36, %34, %37 : vector<4x256xi1>, vector<4x256xf32>
    %c8 = arith.constant 8 : index
    %c0_17 = arith.constant 0 : index
    %39 = vector.load %arg11[%c8, %c0_17] : memref<36x256xf32, #tpu.memory_space<vmem>>, vector<4x256xf32>
    tpu.vector_store %arg11[%c8, %c0_17], %38 {strides = array<i32>} : memref<36x256xf32, #tpu.memory_space<vmem>>, vector<4x256xf32>,
    %c0_18 = arith.constant 0 : index
    %c127 = arith.constant 127 : index
    %40 = vector.load %arg10[%c0_18, %c127] : memref<4x512xf32, #tpu.memory_space<vmem>>, vector<4x256xf32>
    %cst_19 = arith.constant 0.000000e+00 : f32
    %41 = vector.shape_cast %18 : vector<1x256xi1> to vector<1x256xi1>
    %42 = vector.broadcast %41 : vector<1x256xi1> to vector<4x256xi1>
    %43 = vector.broadcast %cst_19 : f32 to vector<4x256xf32>
    %44 = arith.select %42, %40, %43 : vector<4x256xi1>, vector<4x256xf32>
    %c12 = arith.constant 12 : index
    %c0_20 = arith.constant 0 : index
    %45 = vector.load %arg11[%c12, %c0_20] : memref<36x256xf32, #tpu.memory_space<vmem>>, vector<4x256xf32>
    tpu.vector_store %arg11[%c12, %c0_20], %44 {strides = array<i32>} : memref<36x256xf32, #tpu.memory_space<vmem>>, vector<4x256xf32>,
    %c0_21 = arith.constant 0 : index
    %c128_22 = arith.constant 128 : index
    %46 = vector.load %arg10[%c0_21, %c128_22] : memref<4x512xf32, #tpu.memory_space<vmem>>, vector<4x256xf32>
    %c16 = arith.constant 16 : index
    %c0_23 = arith.constant 0 : index
    %47 = vector.load %arg11[%c16, %c0_23] : memref<36x256xf32, #tpu.memory_space<vmem>>, vector<4x256xf32>
    tpu.vector_store %arg11[%c16, %c0_23], %46 {strides = array<i32>} : memref<36x256xf32, #tpu.memory_space<vmem>>, vector<4x256xf32>,
    %c0_24 = arith.constant 0 : index
    %c129 = arith.constant 129 : index
    %48 = vector.load %arg10[%c0_24, %c129] : memref<4x512xf32, #tpu.memory_space<vmem>>, vector<4x256xf32>
    %cst_25 = arith.constant 0.000000e+00 : f32
    %49 = vector.shape_cast %20 : vector<1x256xi1> to vector<1x256xi1>
    %50 = vector.broadcast %49 : vector<1x256xi1> to vector<4x256xi1>
    %51 = vector.broadcast %cst_25 : f32 to vector<4x256xf32>
    %52 = arith.select %50, %48, %51 : vector<4x256xi1>, vector<4x256xf32>
    %c20 = arith.constant 20 : index
    %c0_26 = arith.constant 0 : index
    %53 = vector.load %arg11[%c20, %c0_26] : memref<36x256xf32, #tpu.memory_space<vmem>>, vector<4x256xf32>
    tpu.vector_store %arg11[%c20, %c0_26], %52 {strides = array<i32>} : memref<36x256xf32, #tpu.memory_space<vmem>>, vector<4x256xf32>,
    %c0_27 = arith.constant 0 : index
    %c143 = arith.constant 143 : index
    %54 = vector.load %arg10[%c0_27, %c143] : memref<4x512xf32, #tpu.memory_space<vmem>>, vector<4x256xf32>
    %cst_28 = arith.constant 0.000000e+00 : f32
    %55 = vector.shape_cast %18 : vector<1x256xi1> to vector<1x256xi1>
    %56 = vector.broadcast %55 : vector<1x256xi1> to vector<4x256xi1>
    %57 = vector.broadcast %cst_28 : f32 to vector<4x256xf32>
    %58 = arith.select %56, %54, %57 : vector<4x256xi1>, vector<4x256xf32>
    %c24 = arith.constant 24 : index
    %c0_29 = arith.constant 0 : index
    %59 = vector.load %arg11[%c24, %c0_29] : memref<36x256xf32, #tpu.memory_space<vmem>>, vector<4x256xf32>
    tpu.vector_store %arg11[%c24, %c0_29], %58 {strides = array<i32>} : memref<36x256xf32, #tpu.memory_space<vmem>>, vector<4x256xf32>,
    %c0_30 = arith.constant 0 : index
    %c144 = arith.constant 144 : index
    %60 = vector.load %arg10[%c0_30, %c144] : memref<4x512xf32, #tpu.memory_space<vmem>>, vector<4x256xf32>
    %c28 = arith.constant 28 : index
    %c0_31 = arith.constant 0 : index
    %61 = vector.load %arg11[%c28, %c0_31] : memref<36x256xf32, #tpu.memory_space<vmem>>, vector<4x256xf32>
    tpu.vector_store %arg11[%c28, %c0_31], %60 {strides = array<i32>} : memref<36x256xf32, #tpu.memory_space<vmem>>, vector<4x256xf32>,
    %c0_32 = arith.constant 0 : index
    %c145 = arith.constant 145 : index
    %62 = vector.load %arg10[%c0_32, %c145] : memref<4x512xf32, #tpu.memory_space<vmem>>, vector<4x256xf32>
    %cst_33 = arith.constant 0.000000e+00 : f32
    %63 = vector.shape_cast %20 : vector<1x256xi1> to vector<1x256xi1>
    %64 = vector.broadcast %63 : vector<1x256xi1> to vector<4x256xi1>
    %65 = vector.broadcast %cst_33 : f32 to vector<4x256xf32>
    %66 = arith.select %64, %62, %65 : vector<4x256xi1>, vector<4x256xf32>
    %c32 = arith.constant 32 : index
    %c0_34 = arith.constant 0 : index
    %67 = vector.load %arg11[%c32, %c0_34] : memref<36x256xf32, #tpu.memory_space<vmem>>, vector<4x256xf32>
    tpu.vector_store %arg11[%c32, %c0_34], %66 {strides = array<i32>} : memref<36x256xf32, #tpu.memory_space<vmem>>, vector<4x256xf32>,
    %c0_35 = arith.constant 0 : index
    %c0_36 = arith.constant 0 : index
    %68 = vector.load %arg2[%c0_35, %c0_36] : memref<2x36xf32, #tpu.memory_space<vmem>>, vector<2x36xf32>
    %c0_37 = arith.constant 0 : index
    %c0_38 = arith.constant 0 : index
    %69 = vector.load %arg11[%c0_37, %c0_38] : memref<36x256xf32, #tpu.memory_space<vmem>>, vector<36x256xf32>
    %cst_39 = arith.constant dense<0.000000e+00> : vector<2x256xf32>
    %70 = tpu.matmul %68, %69, %cst_39 {dimension_numbers = #tpu.dot_dimension_numbers<[1], [0], [0], [1], [0, 0, 1, 1], [], []>} : vector<2x36xf32>, vector<36x256xf32>, vector<2x256xf32> -> vector<2x256xf32>
    %cst_40 = arith.constant dense<0.000000e+00> : vector<2xf32>
    %71 = vector.multi_reduction <add>, %70, %cst_40 [1] : vector<2x256xf32> to vector<2xf32>
    %72 = vector.shape_cast %71 : vector<2xf32> to vector<2x1xf32>
    %cst_41 = arith.constant 2.560000e+02 : f32
    %73 = vector.broadcast %cst_41 : f32 to vector<2x1xf32>
    %74 = arith.divf %72, %73 : vector<2x1xf32>
    %75 = vector.broadcast %74 : vector<2x1xf32> to vector<2x256xf32>
    %76 = arith.subf %70, %75 : vector<2x256xf32>
    %77 = arith.mulf %76, %76 : vector<2x256xf32>
    %cst_42 = arith.constant dense<0.000000e+00> : vector<2xf32>
    %78 = vector.multi_reduction <add>, %77, %cst_42 [1] : vector<2x256xf32> to vector<2xf32>
    %79 = vector.shape_cast %78 : vector<2xf32> to vector<2x1xf32>
    %cst_43 = arith.constant 2.560000e+02 : f32
    %80 = vector.broadcast %cst_43 : f32 to vector<2x1xf32>
    %81 = arith.divf %79, %80 : vector<2x1xf32>
    %cst_44 = arith.constant 9.99999974E-6 : f32
    %82 = vector.broadcast %cst_44 : f32 to vector<2x1xf32>
    %83 = arith.addf %81, %82 : vector<2x1xf32>
    %84 = math.rsqrt %83 : vector<2x1xf32>
    %85 = vector.broadcast %84 : vector<2x1xf32> to vector<2x256xf32>
    %86 = arith.mulf %76, %85 : vector<2x256xf32>
    %cst_45 = arith.constant 0.000000e+00 : f32
    %87 = vector.broadcast %cst_45 : f32 to vector<2x256xf32>
    %88 = arith.cmpf oge, %86, %87 : vector<2x256xf32>
    %cst_46 = arith.constant 1.000000e-01 : f32
    %89 = vector.broadcast %cst_46 : f32 to vector<2x256xf32>
    %90 = arith.mulf %89, %86 : vector<2x256xf32>
    %91 = arith.select %88, %86, %90 : vector<2x256xi1>, vector<2x256xf32>
    %c0_47 = arith.constant 0 : index
    %c128_48 = arith.constant 128 : index
    %92 = vector.load %arg10[%c0_47, %c128_48] : memref<4x512xf32, #tpu.memory_space<vmem>>, vector<2x256xf32>
    tpu.vector_store %arg10[%c0_47, %c128_48], %91 {strides = array<i32>} : memref<4x512xf32, #tpu.memory_space<vmem>>, vector<2x256xf32>,
    %c0_49 = arith.constant 0 : index
    %c111_50 = arith.constant 111 : index
    %93 = vector.load %arg10[%c0_49, %c111_50] : memref<4x512xf32, #tpu.memory_space<vmem>>, vector<2x256xf32>
    %cst_51 = arith.constant 0.000000e+00 : f32
    %94 = vector.shape_cast %18 : vector<1x256xi1> to vector<1x256xi1>
    %95 = vector.broadcast %94 : vector<1x256xi1> to vector<2x256xi1>
    %96 = vector.broadcast %cst_51 : f32 to vector<2x256xf32>
    %97 = arith.select %95, %93, %96 : vector<2x256xi1>, vector<2x256xf32>
    %c0_52 = arith.constant 0 : index
    %c0_53 = arith.constant 0 : index
    %98 = vector.load %arg11[%c0_52, %c0_53] : memref<36x256xf32, #tpu.memory_space<vmem>>, vector<2x256xf32>
    tpu.vector_store %arg11[%c0_52, %c0_53], %97 {strides = array<i32>} : memref<36x256xf32, #tpu.memory_space<vmem>>, vector<2x256xf32>,
    %c0_54 = arith.constant 0 : index
    %c112_55 = arith.constant 112 : index
    %99 = vector.load %arg10[%c0_54, %c112_55] : memref<4x512xf32, #tpu.memory_space<vmem>>, vector<2x256xf32>
    %c2 = arith.constant 2 : index
    %c0_56 = arith.constant 0 : index
    %100 = vector.load %arg11[%c2, %c0_56] : memref<36x256xf32, #tpu.memory_space<vmem>>, vector<2x256xf32>
    tpu.vector_store %arg11[%c2, %c0_56], %99 {strides = array<i32>} : memref<36x256xf32, #tpu.memory_space<vmem>>, vector<2x256xf32>,
    %c0_57 = arith.constant 0 : index
    %c113_58 = arith.constant 113 : index
    %101 = vector.load %arg10[%c0_57, %c113_58] : memref<4x512xf32, #tpu.memory_space<vmem>>, vector<2x256xf32>
    %cst_59 = arith.constant 0.000000e+00 : f32
    %102 = vector.shape_cast %20 : vector<1x256xi1> to vector<1x256xi1>
    %103 = vector.broadcast %102 : vector<1x256xi1> to vector<2x256xi1>
    %104 = vector.broadcast %cst_59 : f32 to vector<2x256xf32>
    %105 = arith.select %103, %101, %104 : vector<2x256xi1>, vector<2x256xf32>
    %c4_60 = arith.constant 4 : index
    %c0_61 = arith.constant 0 : index
    %106 = vector.load %arg11[%c4_60, %c0_61] : memref<36x256xf32, #tpu.memory_space<vmem>>, vector<2x256xf32>
    tpu.vector_store %arg11[%c4_60, %c0_61], %105 {strides = array<i32>} : memref<36x256xf32, #tpu.memory_space<vmem>>, vector<2x256xf32>,
    %c0_62 = arith.constant 0 : index
    %c127_63 = arith.constant 127 : index
    %107 = vector.load %arg10[%c0_62, %c127_63] : memref<4x512xf32, #tpu.memory_space<vmem>>, vector<2x256xf32>
    %cst_64 = arith.constant 0.000000e+00 : f32
    %108 = vector.shape_cast %18 : vector<1x256xi1> to vector<1x256xi1>
    %109 = vector.broadcast %108 : vector<1x256xi1> to vector<2x256xi1>
    %110 = vector.broadcast %cst_64 : f32 to vector<2x256xf32>
    %111 = arith.select %109, %107, %110 : vector<2x256xi1>, vector<2x256xf32>
    %c6 = arith.constant 6 : index
    %c0_65 = arith.constant 0 : index
    %112 = vector.load %arg11[%c6, %c0_65] : memref<36x256xf32, #tpu.memory_space<vmem>>, vector<2x256xf32>
    tpu.vector_store %arg11[%c6, %c0_65], %111 {strides = array<i32>} : memref<36x256xf32, #tpu.memory_space<vmem>>, vector<2x256xf32>,
    %c0_66 = arith.constant 0 : index
    %c128_67 = arith.constant 128 : index
    %113 = vector.load %arg10[%c0_66, %c128_67] : memref<4x512xf32, #tpu.memory_space<vmem>>, vector<2x256xf32>
    %c8_68 = arith.constant 8 : index
    %c0_69 = arith.constant 0 : index
    %114 = vector.load %arg11[%c8_68, %c0_69] : memref<36x256xf32, #tpu.memory_space<vmem>>, vector<2x256xf32>
    tpu.vector_store %arg11[%c8_68, %c0_69], %113 {strides = array<i32>} : memref<36x256xf32, #tpu.memory_space<vmem>>, vector<2x256xf32>,
    %c0_70 = arith.constant 0 : index
    %c129_71 = arith.constant 129 : index
    %115 = vector.load %arg10[%c0_70, %c129_71] : memref<4x512xf32, #tpu.memory_space<vmem>>, vector<2x256xf32>
    %cst_72 = arith.constant 0.000000e+00 : f32
    %116 = vector.shape_cast %20 : vector<1x256xi1> to vector<1x256xi1>
    %117 = vector.broadcast %116 : vector<1x256xi1> to vector<2x256xi1>
    %118 = vector.broadcast %cst_72 : f32 to vector<2x256xf32>
    %119 = arith.select %117, %115, %118 : vector<2x256xi1>, vector<2x256xf32>
    %c10 = arith.constant 10 : index
    %c0_73 = arith.constant 0 : index
    %120 = vector.load %arg11[%c10, %c0_73] : memref<36x256xf32, #tpu.memory_space<vmem>>, vector<2x256xf32>
    tpu.vector_store %arg11[%c10, %c0_73], %119 {strides = array<i32>} : memref<36x256xf32, #tpu.memory_space<vmem>>, vector<2x256xf32>,
    %c0_74 = arith.constant 0 : index
    %c143_75 = arith.constant 143 : index
    %121 = vector.load %arg10[%c0_74, %c143_75] : memref<4x512xf32, #tpu.memory_space<vmem>>, vector<2x256xf32>
    %cst_76 = arith.constant 0.000000e+00 : f32
    %122 = vector.shape_cast %18 : vector<1x256xi1> to vector<1x256xi1>
    %123 = vector.broadcast %122 : vector<1x256xi1> to vector<2x256xi1>
    %124 = vector.broadcast %cst_76 : f32 to vector<2x256xf32>
    %125 = arith.select %123, %121, %124 : vector<2x256xi1>, vector<2x256xf32>
    %c12_77 = arith.constant 12 : index
    %c0_78 = arith.constant 0 : index
    %126 = vector.load %arg11[%c12_77, %c0_78] : memref<36x256xf32, #tpu.memory_space<vmem>>, vector<2x256xf32>
    tpu.vector_store %arg11[%c12_77, %c0_78], %125 {strides = array<i32>} : memref<36x256xf32, #tpu.memory_space<vmem>>, vector<2x256xf32>,
    %c0_79 = arith.constant 0 : index
    %c144_80 = arith.constant 144 : index
    %127 = vector.load %arg10[%c0_79, %c144_80] : memref<4x512xf32, #tpu.memory_space<vmem>>, vector<2x256xf32>
    %c14 = arith.constant 14 : index
    %c0_81 = arith.constant 0 : index
    %128 = vector.load %arg11[%c14, %c0_81] : memref<36x256xf32, #tpu.memory_space<vmem>>, vector<2x256xf32>
    tpu.vector_store %arg11[%c14, %c0_81], %127 {strides = array<i32>} : memref<36x256xf32, #tpu.memory_space<vmem>>, vector<2x256xf32>,
    %c0_82 = arith.constant 0 : index
    %c145_83 = arith.constant 145 : index
    %129 = vector.load %arg10[%c0_82, %c145_83] : memref<4x512xf32, #tpu.memory_space<vmem>>, vector<2x256xf32>
    %cst_84 = arith.constant 0.000000e+00 : f32
    %130 = vector.shape_cast %20 : vector<1x256xi1> to vector<1x256xi1>
    %131 = vector.broadcast %130 : vector<1x256xi1> to vector<2x256xi1>
    %132 = vector.broadcast %cst_84 : f32 to vector<2x256xf32>
    %133 = arith.select %131, %129, %132 : vector<2x256xi1>, vector<2x256xf32>
    %c16_85 = arith.constant 16 : index
    %c0_86 = arith.constant 0 : index
    %134 = vector.load %arg11[%c16_85, %c0_86] : memref<36x256xf32, #tpu.memory_space<vmem>>, vector<2x256xf32>
    tpu.vector_store %arg11[%c16_85, %c0_86], %133 {strides = array<i32>} : memref<36x256xf32, #tpu.memory_space<vmem>>, vector<2x256xf32>,
    %c0_87 = arith.constant 0 : index
    %c0_88 = arith.constant 0 : index
    %135 = vector.load %arg3[%c0_87, %c0_88] : memref<4x18xf32, #tpu.memory_space<vmem>>, vector<4x18xf32>
    %c0_89 = arith.constant 0 : index
    %c0_90 = arith.constant 0 : index
    %136 = vector.load %arg11[%c0_89, %c0_90] : memref<36x256xf32, #tpu.memory_space<vmem>>, vector<18x256xf32>
    %cst_91 = arith.constant dense<0.000000e+00> : vector<4x256xf32>
    %137 = tpu.matmul %135, %136, %cst_91 {dimension_numbers = #tpu.dot_dimension_numbers<[1], [0], [0], [1], [0, 0, 1, 1], [], []>} : vector<4x18xf32>, vector<18x256xf32>, vector<4x256xf32> -> vector<4x256xf32>
    %cst_92 = arith.constant dense<0.000000e+00> : vector<4xf32>
    %138 = vector.multi_reduction <add>, %137, %cst_92 [1] : vector<4x256xf32> to vector<4xf32>
    %139 = vector.shape_cast %138 : vector<4xf32> to vector<4x1xf32>
    %cst_93 = arith.constant 2.560000e+02 : f32
    %140 = vector.broadcast %cst_93 : f32 to vector<4x1xf32>
    %141 = arith.divf %139, %140 : vector<4x1xf32>
    %142 = vector.broadcast %141 : vector<4x1xf32> to vector<4x256xf32>
    %143 = arith.subf %137, %142 : vector<4x256xf32>
    %144 = arith.mulf %143, %143 : vector<4x256xf32>
    %cst_94 = arith.constant dense<0.000000e+00> : vector<4xf32>
    %145 = vector.multi_reduction <add>, %144, %cst_94 [1] : vector<4x256xf32> to vector<4xf32>
    %146 = vector.shape_cast %145 : vector<4xf32> to vector<4x1xf32>
    %cst_95 = arith.constant 2.560000e+02 : f32
    %147 = vector.broadcast %cst_95 : f32 to vector<4x1xf32>
    %148 = arith.divf %146, %147 : vector<4x1xf32>
    %cst_96 = arith.constant 9.99999974E-6 : f32
    %149 = vector.broadcast %cst_96 : f32 to vector<4x1xf32>
    %150 = arith.addf %148, %149 : vector<4x1xf32>
    %151 = math.rsqrt %150 : vector<4x1xf32>
    %152 = vector.broadcast %151 : vector<4x1xf32> to vector<4x256xf32>
    %153 = arith.mulf %143, %152 : vector<4x256xf32>
    %cst_97 = arith.constant 0.000000e+00 : f32
    %154 = vector.broadcast %cst_97 : f32 to vector<4x256xf32>
    %155 = arith.cmpf oge, %153, %154 : vector<4x256xf32>
    %cst_98 = arith.constant 1.000000e-01 : f32
    %156 = vector.broadcast %cst_98 : f32 to vector<4x256xf32>
    %157 = arith.mulf %156, %153 : vector<4x256xf32>
    %158 = arith.select %155, %153, %157 : vector<4x256xi1>, vector<4x256xf32>
    %c0_99 = arith.constant 0 : index
    %c128_100 = arith.constant 128 : index
    %159 = vector.load %arg10[%c0_99, %c128_100] : memref<4x512xf32, #tpu.memory_space<vmem>>, vector<4x256xf32>
    tpu.vector_store %arg10[%c0_99, %c128_100], %158 {strides = array<i32>} : memref<4x512xf32, #tpu.memory_space<vmem>>, vector<4x256xf32>,
    %c0_101 = arith.constant 0 : index
    %c111_102 = arith.constant 111 : index
    %160 = vector.load %arg10[%c0_101, %c111_102] : memref<4x512xf32, #tpu.memory_space<vmem>>, vector<4x256xf32>
    %cst_103 = arith.constant 0.000000e+00 : f32
    %161 = vector.shape_cast %18 : vector<1x256xi1> to vector<1x256xi1>
    %162 = vector.broadcast %161 : vector<1x256xi1> to vector<4x256xi1>
    %163 = vector.broadcast %cst_103 : f32 to vector<4x256xf32>
    %164 = arith.select %162, %160, %163 : vector<4x256xi1>, vector<4x256xf32>
    %c0_104 = arith.constant 0 : index
    %c0_105 = arith.constant 0 : index
    %165 = vector.load %arg11[%c0_104, %c0_105] : memref<36x256xf32, #tpu.memory_space<vmem>>, vector<4x256xf32>
    tpu.vector_store %arg11[%c0_104, %c0_105], %164 {strides = array<i32>} : memref<36x256xf32, #tpu.memory_space<vmem>>, vector<4x256xf32>,
    %c0_106 = arith.constant 0 : index
    %c112_107 = arith.constant 112 : index
    %166 = vector.load %arg10[%c0_106, %c112_107] : memref<4x512xf32, #tpu.memory_space<vmem>>, vector<4x256xf32>
    %c4_108 = arith.constant 4 : index
    %c0_109 = arith.constant 0 : index
    %167 = vector.load %arg11[%c4_108, %c0_109] : memref<36x256xf32, #tpu.memory_space<vmem>>, vector<4x256xf32>
    tpu.vector_store %arg11[%c4_108, %c0_109], %166 {strides = array<i32>} : memref<36x256xf32, #tpu.memory_space<vmem>>, vector<4x256xf32>,
    %c0_110 = arith.constant 0 : index
    %c113_111 = arith.constant 113 : index
    %168 = vector.load %arg10[%c0_110, %c113_111] : memref<4x512xf32, #tpu.memory_space<vmem>>, vector<4x256xf32>
    %cst_112 = arith.constant 0.000000e+00 : f32
    %169 = vector.shape_cast %20 : vector<1x256xi1> to vector<1x256xi1>
    %170 = vector.broadcast %169 : vector<1x256xi1> to vector<4x256xi1>
    %171 = vector.broadcast %cst_112 : f32 to vector<4x256xf32>
    %172 = arith.select %170, %168, %171 : vector<4x256xi1>, vector<4x256xf32>
    %c8_113 = arith.constant 8 : index
    %c0_114 = arith.constant 0 : index
    %173 = vector.load %arg11[%c8_113, %c0_114] : memref<36x256xf32, #tpu.memory_space<vmem>>, vector<4x256xf32>
    tpu.vector_store %arg11[%c8_113, %c0_114], %172 {strides = array<i32>} : memref<36x256xf32, #tpu.memory_space<vmem>>, vector<4x256xf32>,
    %c0_115 = arith.constant 0 : index
    %c127_116 = arith.constant 127 : index
    %174 = vector.load %arg10[%c0_115, %c127_116] : memref<4x512xf32, #tpu.memory_space<vmem>>, vector<4x256xf32>
    %cst_117 = arith.constant 0.000000e+00 : f32
    %175 = vector.shape_cast %18 : vector<1x256xi1> to vector<1x256xi1>
    %176 = vector.broadcast %175 : vector<1x256xi1> to vector<4x256xi1>
    %177 = vector.broadcast %cst_117 : f32 to vector<4x256xf32>
    %178 = arith.select %176, %174, %177 : vector<4x256xi1>, vector<4x256xf32>
    %c12_118 = arith.constant 12 : index
    %c0_119 = arith.constant 0 : index
    %179 = vector.load %arg11[%c12_118, %c0_119] : memref<36x256xf32, #tpu.memory_space<vmem>>, vector<4x256xf32>
    tpu.vector_store %arg11[%c12_118, %c0_119], %178 {strides = array<i32>} : memref<36x256xf32, #tpu.memory_space<vmem>>, vector<4x256xf32>,
    %c0_120 = arith.constant 0 : index
    %c128_121 = arith.constant 128 : index
    %180 = vector.load %arg10[%c0_120, %c128_121] : memref<4x512xf32, #tpu.memory_space<vmem>>, vector<4x256xf32>
    %c16_122 = arith.constant 16 : index
    %c0_123 = arith.constant 0 : index
    %181 = vector.load %arg11[%c16_122, %c0_123] : memref<36x256xf32, #tpu.memory_space<vmem>>, vector<4x256xf32>
    tpu.vector_store %arg11[%c16_122, %c0_123], %180 {strides = array<i32>} : memref<36x256xf32, #tpu.memory_space<vmem>>, vector<4x256xf32>,
    %c0_124 = arith.constant 0 : index
    %c129_125 = arith.constant 129 : index
    %182 = vector.load %arg10[%c0_124, %c129_125] : memref<4x512xf32, #tpu.memory_space<vmem>>, vector<4x256xf32>
    %cst_126 = arith.constant 0.000000e+00 : f32
    %183 = vector.shape_cast %20 : vector<1x256xi1> to vector<1x256xi1>
    %184 = vector.broadcast %183 : vector<1x256xi1> to vector<4x256xi1>
    %185 = vector.broadcast %cst_126 : f32 to vector<4x256xf32>
    %186 = arith.select %184, %182, %185 : vector<4x256xi1>, vector<4x256xf32>
    %c20_127 = arith.constant 20 : index
    %c0_128 = arith.constant 0 : index
    %187 = vector.load %arg11[%c20_127, %c0_128] : memref<36x256xf32, #tpu.memory_space<vmem>>, vector<4x256xf32>
    tpu.vector_store %arg11[%c20_127, %c0_128], %186 {strides = array<i32>} : memref<36x256xf32, #tpu.memory_space<vmem>>, vector<4x256xf32>,
    %c0_129 = arith.constant 0 : index
    %c143_130 = arith.constant 143 : index
    %188 = vector.load %arg10[%c0_129, %c143_130] : memref<4x512xf32, #tpu.memory_space<vmem>>, vector<4x256xf32>
    %cst_131 = arith.constant 0.000000e+00 : f32
    %189 = vector.shape_cast %18 : vector<1x256xi1> to vector<1x256xi1>
    %190 = vector.broadcast %189 : vector<1x256xi1> to vector<4x256xi1>
    %191 = vector.broadcast %cst_131 : f32 to vector<4x256xf32>
    %192 = arith.select %190, %188, %191 : vector<4x256xi1>, vector<4x256xf32>
    %c24_132 = arith.constant 24 : index
    %c0_133 = arith.constant 0 : index
    %193 = vector.load %arg11[%c24_132, %c0_133] : memref<36x256xf32, #tpu.memory_space<vmem>>, vector<4x256xf32>
    tpu.vector_store %arg11[%c24_132, %c0_133], %192 {strides = array<i32>} : memref<36x256xf32, #tpu.memory_space<vmem>>, vector<4x256xf32>,
    %c0_134 = arith.constant 0 : index
    %c144_135 = arith.constant 144 : index
    %194 = vector.load %arg10[%c0_134, %c144_135] : memref<4x512xf32, #tpu.memory_space<vmem>>, vector<4x256xf32>
    %c28_136 = arith.constant 28 : index
    %c0_137 = arith.constant 0 : index
    %195 = vector.load %arg11[%c28_136, %c0_137] : memref<36x256xf32, #tpu.memory_space<vmem>>, vector<4x256xf32>
    tpu.vector_store %arg11[%c28_136, %c0_137], %194 {strides = array<i32>} : memref<36x256xf32, #tpu.memory_space<vmem>>, vector<4x256xf32>,
    %c0_138 = arith.constant 0 : index
    %c145_139 = arith.constant 145 : index
    %196 = vector.load %arg10[%c0_138, %c145_139] : memref<4x512xf32, #tpu.memory_space<vmem>>, vector<4x256xf32>
    %cst_140 = arith.constant 0.000000e+00 : f32
    %197 = vector.shape_cast %20 : vector<1x256xi1> to vector<1x256xi1>
    %198 = vector.broadcast %197 : vector<1x256xi1> to vector<4x256xi1>
    %199 = vector.broadcast %cst_140 : f32 to vector<4x256xf32>
    %200 = arith.select %198, %196, %199 : vector<4x256xi1>, vector<4x256xf32>
    %c32_141 = arith.constant 32 : index
    %c0_142 = arith.constant 0 : index
    %201 = vector.load %arg11[%c32_141, %c0_142] : memref<36x256xf32, #tpu.memory_space<vmem>>, vector<4x256xf32>
    tpu.vector_store %arg11[%c32_141, %c0_142], %200 {strides = array<i32>} : memref<36x256xf32, #tpu.memory_space<vmem>>, vector<4x256xf32>,
    %c0_143 = arith.constant 0 : index
    %c0_144 = arith.constant 0 : index
    %202 = vector.load %arg4[%c0_143, %c0_144] : memref<6x36xf32, #tpu.memory_space<vmem>>, vector<6x36xf32>
    %c0_145 = arith.constant 0 : index
    %c0_146 = arith.constant 0 : index
    %203 = vector.load %arg11[%c0_145, %c0_146] : memref<36x256xf32, #tpu.memory_space<vmem>>, vector<36x256xf32>
    %cst_147 = arith.constant dense<0.000000e+00> : vector<6x256xf32>
    %204 = tpu.matmul %202, %203, %cst_147 {dimension_numbers = #tpu.dot_dimension_numbers<[1], [0], [0], [1], [0, 0, 1, 1], [], []>} : vector<6x36xf32>, vector<36x256xf32>, vector<6x256xf32> -> vector<6x256xf32>
    %cst_148 = arith.constant dense<0.000000e+00> : vector<6xf32>
    %205 = vector.multi_reduction <add>, %204, %cst_148 [1] : vector<6x256xf32> to vector<6xf32>
    %206 = vector.shape_cast %205 : vector<6xf32> to vector<6x1xf32>
    %cst_149 = arith.constant 2.560000e+02 : f32
    %207 = vector.broadcast %cst_149 : f32 to vector<6x1xf32>
    %208 = arith.divf %206, %207 : vector<6x1xf32>
    %209 = vector.broadcast %208 : vector<6x1xf32> to vector<6x256xf32>
    %210 = arith.subf %204, %209 : vector<6x256xf32>
    %211 = arith.mulf %210, %210 : vector<6x256xf32>
    %cst_150 = arith.constant dense<0.000000e+00> : vector<6xf32>
    %212 = vector.multi_reduction <add>, %211, %cst_150 [1] : vector<6x256xf32> to vector<6xf32>
    %213 = vector.shape_cast %212 : vector<6xf32> to vector<6x1xf32>
    %cst_151 = arith.constant 2.560000e+02 : f32
    %214 = vector.broadcast %cst_151 : f32 to vector<6x1xf32>
    %215 = arith.divf %213, %214 : vector<6x1xf32>
    %cst_152 = arith.constant 9.99999974E-6 : f32
    %216 = vector.broadcast %cst_152 : f32 to vector<6x1xf32>
    %217 = arith.addf %215, %216 : vector<6x1xf32>
    %218 = math.rsqrt %217 : vector<6x1xf32>
    %219 = vector.broadcast %218 : vector<6x1xf32> to vector<6x256xf32>
    %220 = arith.mulf %210, %219 : vector<6x256xf32>
    %cst_153 = arith.constant 0.000000e+00 : f32
    %221 = vector.broadcast %cst_153 : f32 to vector<6x256xf32>
    %222 = arith.cmpf oge, %220, %221 : vector<6x256xf32>
    %cst_154 = arith.constant 1.000000e-01 : f32
    %223 = vector.broadcast %cst_154 : f32 to vector<6x256xf32>
    %224 = arith.mulf %223, %220 : vector<6x256xf32>
    %225 = arith.select %222, %220, %224 : vector<6x256xi1>, vector<6x256xf32>
    %c0_155 = arith.constant 0 : index
    %c0_156 = arith.constant 0 : index
    %226 = vector.load %arg5[%c0_155, %c0_156] : memref<8x2xf32, #tpu.memory_space<vmem>>, vector<8x2xf32>
    %cst_157 = arith.constant dense<0.000000e+00> : vector<8x256xf32>
    %227 = tpu.matmul %226, %91, %cst_157 {dimension_numbers = #tpu.dot_dimension_numbers<[1], [0], [0], [1], [0, 0, 1, 1], [], []>} : vector<8x2xf32>, vector<2x256xf32>, vector<8x256xf32> -> vector<8x256xf32>
    %c0_158 = arith.constant 0 : index
    %c0_159 = arith.constant 0 : index
    %228 = vector.load %arg6[%c0_158, %c0_159] : memref<8x4xf32, #tpu.memory_space<vmem>>, vector<8x4xf32>
    %cst_160 = arith.constant dense<0.000000e+00> : vector<8x256xf32>
    %229 = tpu.matmul %228, %158, %cst_160 {dimension_numbers = #tpu.dot_dimension_numbers<[1], [0], [0], [1], [0, 0, 1, 1], [], []>} : vector<8x4xf32>, vector<4x256xf32>, vector<8x256xf32> -> vector<8x256xf32>
    %230 = arith.addf %227, %229 : vector<8x256xf32>
    %c0_161 = arith.constant 0 : index
    %c0_162 = arith.constant 0 : index
    %231 = vector.load %arg7[%c0_161, %c0_162] : memref<8x6xf32, #tpu.memory_space<vmem>>, vector<8x6xf32>
    %cst_163 = arith.constant dense<0.000000e+00> : vector<8x256xf32>
    %232 = tpu.matmul %231, %225, %cst_163 {dimension_numbers = #tpu.dot_dimension_numbers<[1], [0], [0], [1], [0, 0, 1, 1], [], []>} : vector<8x6xf32>, vector<6x256xf32>, vector<8x256xf32> -> vector<8x256xf32>
    %233 = arith.addf %230, %232 : vector<8x256xf32>
    %c0_164 = arith.constant 0 : index
    %c0_165 = arith.constant 0 : index
    %234 = vector.load %arg8[%c0_164, %c0_165] : memref<8x4xf32, #tpu.memory_space<vmem>>, vector<8x4xf32>
    %cst_166 = arith.constant dense<0.000000e+00> : vector<8x256xf32>
    %235 = tpu.matmul %234, %24, %cst_166 {dimension_numbers = #tpu.dot_dimension_numbers<[1], [0], [0], [1], [0, 0, 1, 1], [], []>} : vector<8x4xf32>, vector<4x256xf32>, vector<8x256xf32> -> vector<8x256xf32>
    %cst_167 = arith.constant dense<0.000000e+00> : vector<8xf32>
    %236 = vector.multi_reduction <add>, %233, %cst_167 [1] : vector<8x256xf32> to vector<8xf32>
    %237 = vector.shape_cast %236 : vector<8xf32> to vector<8x1xf32>
    %cst_168 = arith.constant 2.560000e+02 : f32
    %238 = vector.broadcast %cst_168 : f32 to vector<8x1xf32>
    %239 = arith.divf %237, %238 : vector<8x1xf32>
    %240 = vector.broadcast %239 : vector<8x1xf32> to vector<8x256xf32>
    %241 = arith.subf %233, %240 : vector<8x256xf32>
    %242 = arith.mulf %241, %241 : vector<8x256xf32>
    %cst_169 = arith.constant dense<0.000000e+00> : vector<8xf32>
    %243 = vector.multi_reduction <add>, %242, %cst_169 [1] : vector<8x256xf32> to vector<8xf32>
    %244 = vector.shape_cast %243 : vector<8xf32> to vector<8x1xf32>
    %cst_170 = arith.constant 2.560000e+02 : f32
    %245 = vector.broadcast %cst_170 : f32 to vector<8x1xf32>
    %246 = arith.divf %244, %245 : vector<8x1xf32>
    %cst_171 = arith.constant 9.99999974E-6 : f32
    %247 = vector.broadcast %cst_171 : f32 to vector<8x1xf32>
    %248 = arith.addf %246, %247 : vector<8x1xf32>
    %249 = math.rsqrt %248 : vector<8x1xf32>
    %250 = vector.broadcast %249 : vector<8x1xf32> to vector<8x256xf32>
    %251 = arith.mulf %241, %250 : vector<8x256xf32>
    %cst_172 = arith.constant 0.000000e+00 : f32
    %252 = vector.broadcast %cst_172 : f32 to vector<8x256xf32>
    %253 = arith.cmpf oge, %251, %252 : vector<8x256xf32>
    %cst_173 = arith.constant 1.000000e-01 : f32
    %254 = vector.broadcast %cst_173 : f32 to vector<8x256xf32>
    %255 = arith.mulf %254, %251 : vector<8x256xf32>
    %256 = arith.select %253, %251, %255 : vector<8x256xi1>, vector<8x256xf32>
    %cst_174 = arith.constant dense<0.000000e+00> : vector<8xf32>
    %257 = vector.multi_reduction <add>, %235, %cst_174 [1] : vector<8x256xf32> to vector<8xf32>
    %258 = vector.shape_cast %257 : vector<8xf32> to vector<8x1xf32>
    %cst_175 = arith.constant 2.560000e+02 : f32
    %259 = vector.broadcast %cst_175 : f32 to vector<8x1xf32>
    %260 = arith.divf %258, %259 : vector<8x1xf32>
    %261 = vector.broadcast %260 : vector<8x1xf32> to vector<8x256xf32>
    %262 = arith.subf %235, %261 : vector<8x256xf32>
    %263 = arith.mulf %262, %262 : vector<8x256xf32>
    %cst_176 = arith.constant dense<0.000000e+00> : vector<8xf32>
    %264 = vector.multi_reduction <add>, %263, %cst_176 [1] : vector<8x256xf32> to vector<8xf32>
    %265 = vector.shape_cast %264 : vector<8xf32> to vector<8x1xf32>
    %cst_177 = arith.constant 2.560000e+02 : f32
    %266 = vector.broadcast %cst_177 : f32 to vector<8x1xf32>
    %267 = arith.divf %265, %266 : vector<8x1xf32>
    %cst_178 = arith.constant 9.99999974E-6 : f32
    %268 = vector.broadcast %cst_178 : f32 to vector<8x1xf32>
    %269 = arith.addf %267, %268 : vector<8x1xf32>
    %270 = math.rsqrt %269 : vector<8x1xf32>
    %271 = vector.broadcast %270 : vector<8x1xf32> to vector<8x256xf32>
    %272 = arith.mulf %262, %271 : vector<8x256xf32>
    %cst_179 = arith.constant 0.000000e+00 : f32
    %273 = vector.broadcast %cst_179 : f32 to vector<8x256xf32>
    %274 = arith.cmpf oge, %272, %273 : vector<8x256xf32>
    %cst_180 = arith.constant 1.000000e-01 : f32
    %275 = vector.broadcast %cst_180 : f32 to vector<8x256xf32>
    %276 = arith.mulf %275, %272 : vector<8x256xf32>
    %277 = arith.select %274, %272, %276 : vector<8x256xi1>, vector<8x256xf32>
    %278 = arith.addf %256, %277 : vector<8x256xf32>
    %c0_181 = arith.constant 0 : index
    %c0_182 = arith.constant 0 : index
    %c0_183 = arith.constant 0 : index
    %279 = vector.load %arg9[%c0_181, %c0_182, %c0_183] : memref<1x8x256xf32, #tpu.memory_space<vmem>>, vector<1x8x256xf32>
    %280 = vector.shape_cast %279 : vector<1x8x256xf32> to vector<8x256xf32>
    %281 = vector.shape_cast %278 : vector<8x256xf32> to vector<1x8x256xf32>
    tpu.vector_store %arg9[%c0_181, %c0_182, %c0_183], %281 {strides = array<i32>} : memref<1x8x256xf32, #tpu.memory_space<vmem>>, vector<1x8x256xf32>,
    return
  }
  func.func @transform_0(%arg0: i32) -> (i32, i32, i32) {
    %c0_i32 = arith.constant 0 : i32
    %c0_i32_0 = arith.constant 0 : i32
    %c0_i32_1 = arith.constant 0 : i32
    return %arg0, %c0_i32, %c0_i32_0 : i32, i32, i32
  }
  func.func @transform_1(%arg0: i32) -> (i32, i32) {
    %c0_i32 = arith.constant 0 : i32
    %c0_i32_0 = arith.constant 0 : i32
    %c0_i32_1 = arith.constant 0 : i32
    return %c0_i32, %c0_i32_0 : i32, i32
  }
  func.func @transform_2(%arg0: i32) -> (i32, i32) {
    %c0_i32 = arith.constant 0 : i32
    %c0_i32_0 = arith.constant 0 : i32
    %c0_i32_1 = arith.constant 0 : i32
    return %c0_i32, %c0_i32_0 : i32, i32
  }
  func.func @transform_3(%arg0: i32) -> (i32, i32) {
    %c0_i32 = arith.constant 0 : i32
    %c0_i32_0 = arith.constant 0 : i32
    %c0_i32_1 = arith.constant 0 : i32
    return %c0_i32, %c0_i32_0 : i32, i32
  }
  func.func @transform_4(%arg0: i32) -> (i32, i32) {
    %c0_i32 = arith.constant 0 : i32
    %c0_i32_0 = arith.constant 0 : i32
    %c0_i32_1 = arith.constant 0 : i32
    return %c0_i32, %c0_i32_0 : i32, i32
  }
  func.func @transform_5(%arg0: i32) -> (i32, i32) {
    %c0_i32 = arith.constant 0 : i32
    %c0_i32_0 = arith.constant 0 : i32
    %c0_i32_1 = arith.constant 0 : i32
    return %c0_i32, %c0_i32_0 : i32, i32
  }
  func.func @transform_6(%arg0: i32) -> (i32, i32) {
    %c0_i32 = arith.constant 0 : i32
    %c0_i32_0 = arith.constant 0 : i32
    %c0_i32_1 = arith.constant 0 : i32
    return %c0_i32, %c0_i32_0 : i32, i32
  }
  func.func @transform_7(%arg0: i32) -> (i32, i32) {
    %c0_i32 = arith.constant 0 : i32
    %c0_i32_0 = arith.constant 0 : i32
    %c0_i32_1 = arith.constant 0 : i32
    return %c0_i32, %c0_i32_0 : i32, i32
  }
  func.func @transform_8(%arg0: i32) -> (i32, i32, i32) {
    %c0_i32 = arith.constant 0 : i32
    %c0_i32_0 = arith.constant 0 : i32
    %c0_i32_1 = arith.constant 0 : i32
    return %arg0, %c0_i32, %c0_i32_0 : i32, i32, i32
  }
}

</mosaic_0001>

<llo_original>
// kernel: rb2_forward.1
$region0: #{rb2_forward.1}
  #allocation0 [shape = 'u32[]', space=smem, size = 0x4, offset = 0x4, fixed_abs, tag = 'smem constant byte address 0x4 - core index']
  #allocation1 [shape = 'u32[144,128]{1,0:T(1,128)}', space=vmem, size = 0x12000, scoped, tag = 'internal scratch']
  #allocation2 [shape = 'f32[4,512]{1,0:T(4,128)}', space=vmem, size = 0x2000, scoped, tag = 'scratch operand']
  #allocation3 [shape = 'f32[36,256]{1,0:T(8,128)}', space=vmem, size = 0xa000, scoped, tag = 'scratch operand']
  %s0 = inlined_call_operand.vmem [shape: f32[2,4,256], index: 0, kind: input, shape index: {}]
  %s1 = inlined_call_operand.vmem [shape: f32[2,36], index: 1, kind: input, shape index: {}]
  %s2 = inlined_call_operand.vmem [shape: f32[4,18], index: 2, kind: input, shape index: {}]
  %s3 = inlined_call_operand.vmem [shape: f32[6,36], index: 3, kind: input, shape index: {}]
  %s4 = inlined_call_operand.vmem [shape: f32[8,2], index: 4, kind: input, shape index: {}]
  %s5 = inlined_call_operand.vmem [shape: f32[8,4], index: 5, kind: input, shape index: {}]
  %s6 = inlined_call_operand.vmem [shape: f32[8,6], index: 6, kind: input, shape index: {}]
  %s7 = inlined_call_operand.vmem [shape: f32[8,4], index: 7, kind: input, shape index: {}]
  %s8 = inlined_call_operand.vmem [shape: f32[2,8,256], index: 8, kind: output, shape index: {}]
  %s9 = sld [smem:[#allocation0]]
  $region65: #{rb2_forward.1} parent=0
    _
  %s11 = ssub.s32 1, %s9
  %s12 = scalar_select 0, %s11, %s9
  loop: start=0, step=1, limit=4
  $region2: #{rb2_forward.1} parent=0 // loop_pre_header
    _
  $region3: #{rb2_forward.1} parent=0 // loop_header
    %s14 = sphi 0, %s18
    %p15 = scmp.ge.s32.totalorder %s14, 4
    %s24 = sphi 0, %s26
    %s27 = sphi 0, %s24
    %s28 = sphi 0, %s27
    %s44 = sphi 0, %s28
    %s48 = sphi 0, %s48
    %s50 = sphi 0, %s48
    %s51 = sphi 0, %s50
    %s65 = sphi 0, %s51
    %s69 = sphi 0, %s69
    %s71 = sphi 0, %s69
    %s72 = sphi 0, %s71
    %s86 = sphi 0, %s72
    %s90 = sphi 0, %s90
    %s92 = sphi 0, %s90
    %s93 = sphi 0, %s92
    %s107 = sphi 0, %s93
    %s111 = sphi 0, %s111
    %s113 = sphi 0, %s111
    %s114 = sphi 0, %s113
    %s128 = sphi 0, %s114
    %s132 = sphi 0, %s132
    %s134 = sphi 0, %s132
    %s135 = sphi 0, %s134
    %s149 = sphi 0, %s135
    %s153 = sphi 0, %s153
    %s155 = sphi 0, %s153
    %s156 = sphi 0, %s155
    %s170 = sphi 0, %s156
    %s174 = sphi 0, %s174
    %s176 = sphi 0, %s174
    %s177 = sphi 0, %s176
    %s191 = sphi 0, %s177
    %s197 = sphi 0, %s199
    %s200 = sphi 0, %s197
    %s201 = sphi 0, %s200
    %s217 = sphi 0, %s201
  $region4: #{rb2_forward.1} parent=0 // loop_header_branch
    %17 = sbr.rel (%p15) target = $region8
  $region5: #{rb2_forward.1} parent=0 // loop_body
    %s19 = ssub.s32 %s14, 1
    %s20 = ssub.s32 %s14, 2
    %s21 = sadd.s32 %s14, 1
    %s22 = ssub.s32 %s14, %s21
    %p23 = scmp.eq.s32.totalorder %s22, 0
    %s25 = sadd.s32 %s24, 1
    %s26 = scalar_select %p23, %s24, %s25
    %p29 = pneg %p23
    %p30 = scmp.eq.s32.totalorder %s14, 1
    %p31 = por %p29, %p30
    %p32 = scmp.ne.s32.totalorder %s24, %s27
    %p33 = scmp.eq.s32.totalorder %s14, 0
    %p34 = por %p32, %p33
    %p35 = scmp.ne.s32.totalorder %s24, %s27
    %p36 = scmp.eq.s32.totalorder %s19, 1
    %p37 = por %p35, %p36
    %p38 = scmp.ne.s32.totalorder %s27, %s28
    %p39 = scmp.eq.s32.totalorder %s19, 0
    %p40 = por %p38, %p39
    %p41 = scmp.ne.s32.totalorder %s27, %s28
    %p42 = scmp.eq.s32.totalorder %s20, 1
    %p43 = por %p41, %p42
    %p45 = scmp.ne.s32.totalorder %s28, %s44
    %p46 = scmp.eq.s32.totalorder %s20, 0
    %p47 = por %p45, %p46
    %s49 = sadd.s32 %s48, 1
    %p52 = scmp.eq.s32.totalorder %s14, 1
    %p53 = scmp.ne.s32.totalorder %s48, %s50
    %p54 = scmp.eq.s32.totalorder %s14, 0
    %p55 = por %p53, %p54
    %p56 = scmp.ne.s32.totalorder %s48, %s50
    %p57 = scmp.eq.s32.totalorder %s19, 1
    %p58 = por %p56, %p57
    %p59 = scmp.ne.s32.totalorder %s50, %s51
    %p60 = scmp.eq.s32.totalorder %s19, 0
    %p61 = por %p59, %p60
    %p62 = scmp.ne.s32.totalorder %s50, %s51
    %p63 = scmp.eq.s32.totalorder %s20, 1
    %p64 = por %p62, %p63
    %p66 = scmp.ne.s32.totalorder %s51, %s65
    %p67 = scmp.eq.s32.totalorder %s20, 0
    %p68 = por %p66, %p67
    %s70 = sadd.s32 %s69, 1
    %p73 = scmp.eq.s32.totalorder %s14, 1
    %p74 = scmp.ne.s32.totalorder %s69, %s71
    %p75 = scmp.eq.s32.totalorder %s14, 0
    %p76 = por %p74, %p75
    %p77 = scmp.ne.s32.totalorder %s69, %s71
    %p78 = scmp.eq.s32.totalorder %s19, 1
    %p79 = por %p77, %p78
    %p80 = scmp.ne.s32.totalorder %s71, %s72
    %p81 = scmp.eq.s32.totalorder %s19, 0
    %p82 = por %p80, %p81
    %p83 = scmp.ne.s32.totalorder %s71, %s72
    %p84 = scmp.eq.s32.totalorder %s20, 1
    %p85 = por %p83, %p84
    %p87 = scmp.ne.s32.totalorder %s72, %s86
    %p88 = scmp.eq.s32.totalorder %s20, 0
    %p89 = por %p87, %p88
    %s91 = sadd.s32 %s90, 1
    %p94 = scmp.eq.s32.totalorder %s14, 1
    %p95 = scmp.ne.s32.totalorder %s90, %s92
    %p96 = scmp.eq.s32.totalorder %s14, 0
    %p97 = por %p95, %p96
    %p98 = scmp.ne.s32.totalorder %s90, %s92
    %p99 = scmp.eq.s32.totalorder %s19, 1
    %p100 = por %p98, %p99
    %p101 = scmp.ne.s32.totalorder %s92, %s93
    %p102 = scmp.eq.s32.totalorder %s19, 0
    %p103 = por %p101, %p102
    %p104 = scmp.ne.s32.totalorder %s92, %s93
    %p105 = scmp.eq.s32.totalorder %s20, 1
    %p106 = por %p104, %p105
    %p108 = scmp.ne.s32.totalorder %s93, %s107
    %p109 = scmp.eq.s32.totalorder %s20, 0
    %p110 = por %p108, %p109
    %s112 = sadd.s32 %s111, 1
    %p115 = scmp.eq.s32.totalorder %s14, 1
    %p116 = scmp.ne.s32.totalorder %s111, %s113
    %p117 = scmp.eq.s32.totalorder %s14, 0
    %p118 = por %p116, %p117
    %p119 = scmp.ne.s32.totalorder %s111, %s113
    %p120 = scmp.eq.s32.totalorder %s19, 1
    %p121 = por %p119, %p120
    %p122 = scmp.ne.s32.totalorder %s113, %s114
    %p123 = scmp.eq.s32.totalorder %s19, 0
    %p124 = por %p122, %p123
    %p125 = scmp.ne.s32.totalorder %s113, %s114
    %p126 = scmp.eq.s32.totalorder %s20, 1
    %p127 = por %p125, %p126
    %p129 = scmp.ne.s32.totalorder %s114, %s128
    %p130 = scmp.eq.s32.totalorder %s20, 0
    %p131 = por %p129, %p130
    %s133 = sadd.s32 %s132, 1
    %p136 = scmp.eq.s32.totalorder %s14, 1
    %p137 = scmp.ne.s32.totalorder %s132, %s134
    %p138 = scmp.eq.s32.totalorder %s14, 0
    %p139 = por %p137, %p138
    %p140 = scmp.ne.s32.totalorder %s132, %s134
    %p141 = scmp.eq.s32.totalorder %s19, 1
    %p142 = por %p140, %p141
    %p143 = scmp.ne.s32.totalorder %s134, %s135
    %p144 = scmp.eq.s32.totalorder %s19, 0
    %p145 = por %p143, %p144
    %p146 = scmp.ne.s32.totalorder %s134, %s135
    %p147 = scmp.eq.s32.totalorder %s20, 1
    %p148 = por %p146, %p147
    %p150 = scmp.ne.s32.totalorder %s135, %s149
    %p151 = scmp.eq.s32.totalorder %s20, 0
    %p152 = por %p150, %p151
    %s154 = sadd.s32 %s153, 1
    %p157 = scmp.eq.s32.totalorder %s14, 1
    %p158 = scmp.ne.s32.totalorder %s153, %s155
    %p159 = scmp.eq.s32.totalorder %s14, 0
    %p160 = por %p158, %p159
    %p161 = scmp.ne.s32.totalorder %s153, %s155
    %p162 = scmp.eq.s32.totalorder %s19, 1
    %p163 = por %p161, %p162
    %p164 = scmp.ne.s32.totalorder %s155, %s156
    %p165 = scmp.eq.s32.totalorder %s19, 0
    %p166 = por %p164, %p165
    %p167 = scmp.ne.s32.totalorder %s155, %s156
    %p168 = scmp.eq.s32.totalorder %s20, 1
    %p169 = por %p167, %p168
    %p171 = scmp.ne.s32.totalorder %s156, %s170
    %p172 = scmp.eq.s32.totalorder %s20, 0
    %p173 = por %p171, %p172
    %s175 = sadd.s32 %s174, 1
    %p178 = scmp.eq.s32.totalorder %s14, 1
    %p179 = scmp.ne.s32.totalorder %s174, %s176
    %p180 = scmp.eq.s32.totalorder %s14, 0
    %p181 = por %p179, %p180
    %p182 = scmp.ne.s32.totalorder %s174, %s176
    %p183 = scmp.eq.s32.totalorder %s19, 1
    %p184 = por %p182, %p183
    %p185 = scmp.ne.s32.totalorder %s176, %s177
    %p186 = scmp.eq.s32.totalorder %s19, 0
    %p187 = por %p185, %p186
    %p188 = scmp.ne.s32.totalorder %s176, %s177
    %p189 = scmp.eq.s32.totalorder %s20, 1
    %p190 = por %p188, %p189
    %p192 = scmp.ne.s32.totalorder %s177, %s191
    %p193 = scmp.eq.s32.totalorder %s20, 0
    %p194 = por %p192, %p193
    %s195 = ssub.s32 %s14, %s21
    %p196 = scmp.eq.s32.totalorder %s195, 0
    %s198 = sadd.s32 %s197, 1
    %s199 = scalar_select %p196, %s197, %s198
    %p202 = pneg %p196
    %p203 = scmp.eq.s32.totalorder %s14, 1
    %p204 = por %p202, %p203
    %p205 = scmp.ne.s32.totalorder %s197, %s200
    %p206 = scmp.eq.s32.totalorder %s14, 0
    %p207 = por %p205, %p206
    %p208 = scmp.ne.s32.totalorder %s197, %s200
    %p209 = scmp.eq.s32.totalorder %s19, 1
    %p210 = por %p208, %p209
    %p211 = scmp.ne.s32.totalorder %s200, %s201
    %p212 = scmp.eq.s32.totalorder %s19, 0
    %p213 = por %p211, %p212
    %p214 = scmp.ne.s32.totalorder %s200, %s201
    %p215 = scmp.eq.s32.totalorder %s20, 1
    %p216 = por %p214, %p215
    %p218 = scmp.ne.s32.totalorder %s201, %s217
    %p219 = scmp.eq.s32.totalorder %s20, 0
    %p220 = por %p218, %p219
    %p221 = scmp.le.s32.totalorder 1, %s14
    %p222 = scmp.lt.s32.totalorder %s14, 3
    %p223 = pnand %p221, %p222
    %p224 = pneg %p223
    // Predicated region
    $region9: #{rb2_forward.1} parent=5 // pred_check
      _
    $region10: #{rb2_forward.1} parent=5 // pred_check_branch
      %226 = sbr.rel (%p223) target = $region12
    $region11: #{rb2_forward.1} parent=5 // pred_region
      %s227 = ssub.s32 %s14, 1
      // Predicated region
      $region13: #{rb2_forward.1} parent=11 // pred_check
        %p228 = pneg %p61
      $region14: #{rb2_forward.1} parent=11 // pred_check_branch
        %230 = sbr.rel (%p228) target = $region16
      $region15: #{rb2_forward.1} parent=11 // pred_region
        _
      $region16: #{rb2_forward.1} parent=11 // pred_fallthru
        _
      // Predicated region
      $region17: #{rb2_forward.1} parent=11 // pred_check
        %p231 = pneg %p82
      $region18: #{rb2_forward.1} parent=11 // pred_check_branch
        %233 = sbr.rel (%p231) target = $region20
      $region19: #{rb2_forward.1} parent=11 // pred_region
        _
      $region20: #{rb2_forward.1} parent=11 // pred_fallthru
        _
      // Predicated region
      $region21: #{rb2_forward.1} parent=11 // pred_check
        %p234 = pneg %p103
      $region22: #{rb2_forward.1} parent=11 // pred_check_branch
        %236 = sbr.rel (%p234) target = $region24
      $region23: #{rb2_forward.1} parent=11 // pred_region
        _
      $region24: #{rb2_forward.1} parent=11 // pred_fallthru
        _
      // Predicated region
      $region25: #{rb2_forward.1} parent=11 // pred_check
        %p237 = pneg %p124
      $region26: #{rb2_forward.1} parent=11 // pred_check_branch
        %239 = sbr.rel (%p237) target = $region28
      $region27: #{rb2_forward.1} parent=11 // pred_region
        _
      $region28: #{rb2_forward.1} parent=11 // pred_fallthru
        _
      // Predicated region
      $region29: #{rb2_forward.1} parent=11 // pred_check
        %p240 = pneg %p145
      $region30: #{rb2_forward.1} parent=11 // pred_check_branch
        %242 = sbr.rel (%p240) target = $region32
      $region31: #{rb2_forward.1} parent=11 // pred_region
        _
      $region32: #{rb2_forward.1} parent=11 // pred_fallthru
        _
      // Predicated region
      $region33: #{rb2_forward.1} parent=11 // pred_check
        %p243 = pneg %p166
      $region34: #{rb2_forward.1} parent=11 // pred_check_branch
        %245 = sbr.rel (%p243) target = $region36
      $region35: #{rb2_forward.1} parent=11 // pred_region
        _
      $region36: #{rb2_forward.1} parent=11 // pred_fallthru
        _
      // Predicated region
      $region37: #{rb2_forward.1} parent=11 // pred_check
        %p246 = pneg %p187
      $region38: #{rb2_forward.1} parent=11 // pred_check_branch
        %248 = sbr.rel (%p246) target = $region40
      $region39: #{rb2_forward.1} parent=11 // pred_region
        _
      $region40: #{rb2_forward.1} parent=11 // pred_fallthru
        _
    $region12: #{rb2_forward.1} parent=5 // pred_fallthru
      _
    %p249 = scmp.lt.s32.totalorder %s14, 2
    // Predicated region
    $region41: #{rb2_forward.1} parent=5 // pred_check
      %p250 = pneg %p249
    $region42: #{rb2_forward.1} parent=5 // pred_check_branch
      %252 = sbr.rel (%p250) target = $region44
    $region43: #{rb2_forward.1} parent=5 // pred_region
      // Predicated region
      $region45: #{rb2_forward.1} parent=43 // pred_check
        %p253 = pneg %p34
      $region46: #{rb2_forward.1} parent=43 // pred_check_branch
        %255 = sbr.rel (%p253) target = $region48
      $region47: #{rb2_forward.1} parent=43 // pred_region
        %p256 = scmp.lt.s32.totalorder %s14, 1
        %s257 = scalar_select %p256, %s14, 1
        %s258 = smul.addr %s257, 2
        %s259 = smul.addr %s258, 4
        %s260 = scalar_lea.vmem %s0, %s259
      $region48: #{rb2_forward.1} parent=43 // pred_fallthru
        _
    $region44: #{rb2_forward.1} parent=5 // pred_fallthru
      _
    %p261 = scmp.le.s32.totalorder 1, %s14
    %p262 = scmp.lt.s32.totalorder %s14, 3
    %p263 = pnand %p261, %p262
    %p264 = pneg %p263
    // Predicated region
    $region49: #{rb2_forward.1} parent=5 // pred_check
      _
    $region50: #{rb2_forward.1} parent=5 // pred_check_branch
      %266 = sbr.rel (%p263) target = $region52
    $region51: #{rb2_forward.1} parent=5 // pred_region
      %s267 = ssub.s32 %s14, 1
      %p268 = scmp.lt.s32.totalorder %s19, 1
      %s269 = scalar_select %p268, %s19, 1
      %s270 = smul.addr %s269, 2
      %s271 = smul.addr %s270, 4
      %s272 = scalar_lea.vmem %s0, %s271
      %p273 = pneg %p40
      %p274 = pneg %p37
      %p275 = pneg %p61
      %p276 = pneg %p58
      %p277 = pneg %p82
      %p278 = pneg %p79
      %p279 = pneg %p103
      %p280 = pneg %p100
      %p281 = pneg %p124
      %p282 = pneg %p121
      %p283 = pneg %p145
      %p284 = pneg %p142
      %p285 = pneg %p166
      %p286 = pneg %p163
      %p287 = pneg %p187
      %p288 = pneg %p184
      %p289 = pneg %p213
      %p290 = pneg %p210
      %p291 = scmp.lt.s32.totalorder %s19, 1
      %s292 = scalar_select %p291, %s19, 1
      %s293 = smul.addr %s292, 2
      %s294 = smul.addr %s293, 8
      %s295 = scalar_lea.vmem %s8, %s294
      %p296 = scmp.lt.s32.totalorder %s19, 1
      %s297 = scalar_select %p296, %s19, 1
      %s298 = smul.addr %s297, 2
      %s299 = smul.addr %s298, 4
      %s300 = scalar_lea.vmem %s0, %s299
      %p301 = scmp.lt.s32.totalorder %s19, 1
      %s302 = scalar_select %p301, %s19, 1
      %s303 = smul.addr %s302, 2
      %s304 = smul.addr %s303, 8
      %s305 = scalar_lea.vmem %s8, %s304
      %v306 = vlaneseq
      %v307 = vand.u32 %v306, 127
      %v308 = vadd.s32 %v307, 128
      %vm309 = vcmp.lt.s32.totalorder %v307, 0
      %v310 = vsub.s32 0, %v307
      %v311 = vsel %vm309, %v310, %v307
      %v312 = vshrl.u32 %v311, 4
      %v313 = vand.u32 %v311, 15
      %v314 = vsub.s32 0, %v313
      %v315 = vsel %vm309, %v314, %v313
      %vm316 = vcmp.lt.s32.totalorder %v308, 0
      %v317 = vsub.s32 0, %v308
      %v318 = vsel %vm316, %v317, %v308
      %v319 = vshrl.u32 %v318, 4
      %v320 = vand.u32 %v318, 15
      %v321 = vsub.s32 0, %v320
      %v322 = vsel %vm316, %v321, %v320
      %vm323 = vcmp.ne.s32.totalorder %v315, 0
      %vm324 = vcmp.ne.s32.totalorder %v322, 0
      %vm325 = vcmp.lt.s32.totalorder %v315, 0
      %vm326 = vcmp.lt.s32.totalorder %v322, 0
      %vm327 = vmand %vm325, %vm323
      %vm328 = vmand %vm326, %vm324
      %v329 = vadd.s32 %v315, 16
      %v330 = vadd.s32 %v322, 16
      %v331 = vsel %vm327, %v329, %v315
      %v332 = vsel %vm328, %v330, %v322
      %vm333 = vcmp.ge.s32.totalorder %v331, 1
      %vm334 = vcmp.ge.s32.totalorder %v332, 1
      %vm335 = vcmp.le.s32.totalorder %v331, 14
      %vm336 = vcmp.le.s32.totalorder %v332, 14
      %337 = vst [vmem:[#allocation2] sm:$0xff] 0.0
      %338 = vst [vmem:[#allocation2 + $0x8] sm:$0xff] 0.0
      %v339 = vld [vmem:[%s300] sm:$0xff]
      %340 = vst [vmem:[#allocation2 + $0x4] sm:$0xff] %v339
      %v341 = vld [vmem:[#allocation2] sm:$0xff]
      %v342 = vld [vmem:[#allocation2 + $0x8] sm:$0xf]
      %v343 = vsel %vm333, 1, 0
      %v344 = vsel %vm334, 1, 0
      %vm345 = vcmp.eq.s32.totalorder %v343, 1
      %vm346 = vcmp.eq.s32.totalorder %v344, 1
      %v349 = vcombine.high %v341, %v341
      %350 = vrot.lane.b32.xlu0 %v341, 17
      %v351 = vpop.permute.xlu0 %350
      %352 = vrot.lane.b32.xlu0 %v349, 17
      %v353 = vpop.permute.xlu0 %352
      %354 = vrot.lane.b32.xlu0 %v342, 17
      %v355 = vpop.permute.xlu0 %354
      %vm356 = vcmask 138240
      %v357 = vsel %vm356, %v351, %v353
      %v358 = vsel %vm356, %v353, %v355
      %v361 = vsel %vm345, %v357, 0.0
      %v362 = vsel %vm346, %v358, 0.0
      %363 = vst [vmem:[#allocation3] sm:$0xf] %v361
      %364 = vst [vmem:[#allocation3 + $0x8] sm:$0xf] %v362
      %v365 = vld [vmem:[#allocation2] sm:$0xff]
      %v366 = vld [vmem:[#allocation2 + $0x8] sm:$0xf]
      %v369 = vcombine.low %v365, %v365
      %v370 = vcombine.low %v366, %v366
      %371 = vrot.lane.b32.xlu0 %v369, 16
      %v372 = vpop.permute.xlu0 %371
      %373 = vrot.lane.b32.xlu0 %v365, 16
      %v374 = vpop.permute.xlu0 %373
      %375 = vrot.lane.b32.xlu0 %v370, 16
      %v376 = vpop.permute.xlu0 %375
      %vm377 = vcmask 130048
      %v378 = vsel %vm377, %v372, %v374
      %v379 = vsel %vm377, %v374, %v376
      %382 = vst [vmem:[#allocation3] sm:$0xf0] %v378
      %383 = vst [vmem:[#allocation3 + $0x8] sm:$0xf0] %v379
      %v384 = vld [vmem:[#allocation2] sm:$0xff]
      %v385 = vld [vmem:[#allocation2 + $0x8] sm:$0xf]
      %v386 = vsel %vm335, 1, 0
      %v387 = vsel %vm336, 1, 0
      %vm388 = vcmp.eq.s32.totalorder %v386, 1
      %vm389 = vcmp.eq.s32.totalorder %v387, 1
      %v392 = vcombine.high %v384, %v384
      %393 = vrot.lane.b32.xlu0 %v384, 15
      %v394 = vpop.permute.xlu0 %393
      %395 = vrot.lane.b32.xlu0 %v392, 15
      %v396 = vpop.permute.xlu0 %395
      %397 = vrot.lane.b32.xlu0 %v385, 15
      %v398 = vpop.permute.xlu0 %397
      %vm399 = vcmask 121856
      %v400 = vsel %vm399, %v394, %v396
      %v401 = vsel %vm399, %v396, %v398
      %v404 = vsel %vm388, %v400, 0.0
      %v405 = vsel %vm389, %v401, 0.0
      %406 = vst [vmem:[#allocation3 + $0x10] sm:$0xf] %v404
      %407 = vst [vmem:[#allocation3 + $0x18] sm:$0xf] %v405
      %v408 = vld [vmem:[#allocation2] sm:$0xff]
      %v409 = vld [vmem:[#allocation2 + $0x8] sm:$0xf]
      %v412 = vcombine.high %v408, %v408
      %413 = vrot.lane.b32.xlu0 %v408, 1
      %v414 = vpop.permute.xlu0 %413
      %415 = vrot.lane.b32.xlu0 %v412, 1
      %v416 = vpop.permute.xlu0 %415
      %417 = vrot.lane.b32.xlu0 %v409, 1
      %v418 = vpop.permute.xlu0 %417
      %vm419 = vcmask 7168
      %v420 = vsel %vm419, %v414, %v416
      %v421 = vsel %vm419, %v416, %v418
      %v424 = vsel %vm345, %v420, 0.0
      %v425 = vsel %vm346, %v421, 0.0
      %v428 = vrot.slane %v424, 4
      %v429 = vrot.slane %v425, 4
      %432 = vst [vmem:[#allocation3 + $0x10] sm:$0xf0] %v428
      %433 = vst [vmem:[#allocation3 + $0x18] sm:$0xf0] %v429
      %v434 = vld [vmem:[#allocation2 + $0x4] sm:$0xff]
      %v436 = vcombine.high %v434, %v434
      %438 = vst [vmem:[#allocation3 + $0x20] sm:$0xf] %v434
      %439 = vst [vmem:[#allocation3 + $0x28] sm:$0xf] %v436
      %v440 = vld [vmem:[#allocation2 + $0x4] sm:$0xff]
      %v441 = vld [vmem:[#allocation2 + $0xc] sm:$0xf]
      %v444 = vcombine.high %v440, %v440
      %445 = vrot.lane.b32.xlu0 %v440, 127
      %v446 = vpop.permute.xlu0 %445
      %447 = vrot.lane.b32.xlu0 %v444, 127
      %v448 = vpop.permute.xlu0 %447
      %449 = vrot.lane.b32.xlu0 %v441, 127
      %v450 = vpop.permute.xlu0 %449
      %vm451 = vcmask 1039360
      %v452 = vsel %vm451, %v446, %v448
      %v453 = vsel %vm451, %v448, %v450
      %v456 = vsel %vm388, %v452, 0.0
      %v457 = vsel %vm389, %v453, 0.0
      %v460 = vrot.slane %v456, 4
      %v461 = vrot.slane %v457, 4
      %464 = vst [vmem:[#allocation3 + $0x20] sm:$0xf0] %v460
      %465 = vst [vmem:[#allocation3 + $0x28] sm:$0xf0] %v461
      %v466 = vld [vmem:[#allocation2 + $0x4] sm:$0xff]
      %v467 = vld [vmem:[#allocation2 + $0xc] sm:$0xf]
      %v470 = vcombine.high %v466, %v466
      %471 = vrot.lane.b32.xlu0 %v466, 113
      %v472 = vpop.permute.xlu0 %471
      %473 = vrot.lane.b32.xlu0 %v470, 113
      %v474 = vpop.permute.xlu0 %473
      %475 = vrot.lane.b32.xlu0 %v467, 113
      %v476 = vpop.permute.xlu0 %475
      %vm477 = vcmask 924672
      %v478 = vsel %vm477, %v472, %v474
      %v479 = vsel %vm477, %v474, %v476
      %v482 = vsel %vm345, %v478, 0.0
      %v483 = vsel %vm346, %v479, 0.0
      %484 = vst [vmem:[#allocation3 + $0x30] sm:$0xf] %v482
      %485 = vst [vmem:[#allocation3 + $0x38] sm:$0xf] %v483
      %v486 = vld [vmem:[#allocation2 + $0x4] sm:$0xff]
      %v487 = vld [vmem:[#allocation2 + $0xc] sm:$0xf]
      %v490 = vcombine.low %v486, %v486
      %v491 = vcombine.low %v487, %v487
      %492 = vrot.lane.b32.xlu0 %v490, 112
      %v493 = vpop.permute.xlu0 %492
      %494 = vrot.lane.b32.xlu0 %v486, 112
      %v495 = vpop.permute.xlu0 %494
      %496 = vrot.lane.b32.xlu0 %v491, 112
      %v497 = vpop.permute.xlu0 %496
      %vm498 = vcmask 916480
      %v499 = vsel %vm498, %v493, %v495
      %v500 = vsel %vm498, %v495, %v497
      %503 = vst [vmem:[#allocation3 + $0x30] sm:$0xf0] %v499
      %504 = vst [vmem:[#allocation3 + $0x38] sm:$0xf0] %v500
      %v505 = vld [vmem:[#allocation2 + $0x4] sm:$0xff]
      %v506 = vld [vmem:[#allocation2 + $0xc] sm:$0xf]
      %v509 = vcombine.high %v505, %v505
      %510 = vrot.lane.b32.xlu0 %v505, 111
      %v511 = vpop.permute.xlu0 %510
      %512 = vrot.lane.b32.xlu0 %v509, 111
      %v513 = vpop.permute.xlu0 %512
      %514 = vrot.lane.b32.xlu0 %v506, 111
      %v515 = vpop.permute.xlu0 %514
      %vm516 = vcmask 908288
      %v517 = vsel %vm516, %v511, %v513
      %v518 = vsel %vm516, %v513, %v515
      %v521 = vsel %vm388, %v517, 0.0
      %v522 = vsel %vm389, %v518, 0.0
      %523 = vst [vmem:[#allocation3 + $0x40] sm:$0xf] %v521
      %524 = vst [vmem:[#allocation3 + $0x48] sm:$0xf] %v522
      %v525 = vld [vmem:[%s1] sm:$0x3]
      %v526 = vld [vmem:[#allocation3] sm:$0xff]
      %v527 = vld [vmem:[#allocation3 + $0x8] sm:$0xff]
      %v528 = vld [vmem:[#allocation3 + $0x10] sm:$0xff]
      %v529 = vld [vmem:[#allocation3 + $0x18] sm:$0xff]
      %v530 = vld [vmem:[#allocation3 + $0x20] sm:$0xff]
      %v531 = vld [vmem:[#allocation3 + $0x28] sm:$0xff]
      %v532 = vld [vmem:[#allocation3 + $0x30] sm:$0xff]
      %v533 = vld [vmem:[#allocation3 + $0x38] sm:$0xff]
      %v534 = vld [vmem:[#allocation3 + $0x40] sm:$0xf]
      %v535 = vld [vmem:[#allocation3 + $0x48] sm:$0xf]
      %vm536 = vcmask 293888
      %v538 = vsel %vm536, %v525, 0
      %vm540 = vcmask 1043456
      %v542 = vsel %vm540, %v534, 0
      %v545 = vsel %vm540, %v535, 0
      %547 = vmatprep.subr.mxu0 0.0
      %548 = vmatpush1.msra.mxu0 0.0
      %549 = vmatprep.subr.mxu0 0.0
      %550 = vmatpush1.msra.mxu0 0.0
      %551 = vmatprep.subr.mxu0 0.0
      %552 = vmatpush1.msra.mxu0 0.0
      %553 = vmatprep.subr.mxu0 0.0
      %554 = vmatpush1.msra.mxu0 0.0
      %555 = vmatprep.subr.mxu0 0.0
      %556 = vmatpush1.msra.mxu0 0.0
      %557 = vmatprep.subr.mxu0 0.0
      %558 = vmatpush1.msra.mxu0 0.0
      %559 = vmatprep.subr.mxu0 0.0
      %560 = vmatpush1.msra.mxu0 0.0
      %561 = vmatprep.subr.mxu0 0.0
      %562 = vmatpush1.msra.mxu0 0.0
      %563 = vmatprep.subr.mxu0 0.0
      %564 = vmatpush1.msra.mxu0 0.0
      %565 = vmatprep.subr.mxu0 0.0
      %566 = vmatpush1.msra.mxu0 0.0
      %567 = vmatprep.subr.mxu0 0.0
      %568 = vmatpush1.msra.mxu0 0.0
      %569 = vmatprep.subr.mxu0 %v545
      %570 = vmatpush1.msra.mxu0 %v542
      %571 = vmatprep.subr.mxu0 %v533
      %572 = vmatpush1.msra.mxu0 %v532
      %573 = vmatprep.subr.mxu0 %v531
      %574 = vmatpush1.msra.mxu0 %v530
      %575 = vmatprep.subr.mxu0 %v529
      %576 = vmatpush1.msra.mxu0 %v528
      %577 = vmatprep.subr.mxu0 %v527
      %578 = vmatpush1.msra.mxu0 %v526
      %579 = vmatprep.subr.mxu0 0.0
      %580 = vmatpush2.msra.mxu0 0.0
      %581 = vmatprep.subr.mxu0 0.0
      %582 = vmatpush2.msra.mxu0 0.0
      %583 = vmatprep.subr.mxu0 0.0
      %584 = vmatpush2.msra.mxu0 0.0
      %585 = vmatprep.subr.mxu0 0.0
      %586 = vmatpush2.msra.mxu0 0.0
      %587 = vmatprep.subr.mxu0 0.0
      %588 = vmatpush2.msra.mxu0 0.0
      %589 = vmatprep.subr.mxu0 0.0
      %590 = vmatpush2.msra.mxu0 0.0
      %591 = vmatprep.subr.mxu0 0.0
      %592 = vmatpush2.msra.mxu0 0.0
      %593 = vmatprep.subr.mxu0 0.0
      %594 = vmatpush2.msra.mxu0 0.0
      %595 = vmatprep.subr.mxu0 0.0
      %596 = vmatpush2.msra.mxu0 0.0
      %597 = vmatprep.subr.mxu0 0.0
      %598 = vmatpush2.msra.mxu0 0.0
      %599 = vmatprep.subr.mxu0 0.0
      %600 = vmatpush2.msra.mxu0 0.0
      %601 = vmatprep.subr.mxu0 0.0
      %602 = vmatpush2.msra.mxu0 0.0
      %603 = vmatprep.subr.mxu0 0.0
      %604 = vmatpush2.msra.mxu0 0.0
      %605 = vmatprep.subr.mxu0 0.0
      %606 = vmatpush2.msra.mxu0 0.0
      %607 = vmatprep.subr.mxu0 0.0
      %608 = vmatpush2.msra.mxu0 0.0
      %609 = vmatprep.subr.mxu0 0.0
      %610 = vmatpush2.msra.mxu0 0.0
      %611 = vmatprep.mubr.f32.mxu0 0.0
      %612 = vmatmul.mubr.f32.gmra.mxu0 %v538
      %v613 = vpop.f32.mrf.mxu0
      %v614 = vadd.f32 0.0, %v613
      %v615 = vpop.f32.mrf.mxu0
      %v616 = vadd.f32 0.0, %v615
      %617 = vdwg.mxu0
      %vm618 = vcmask 1041408
      %v619 = vsel %vm618, %v614, 0.0
      %v620 = vsel %vm618, %v616, 0.0
      %v621 = vadd.f32 %v619, %v620
      %622 = vadd.xlane.f32.xlu0 %v621
      %v623 = vpop.xlane.xlu0 %622
      %v624 = vrcp.pop 256.0
      %v625 = vmul.f32 %v623, %v624
      %v626 = vsub.f32 %v614, %v625
      %v627 = vsub.f32 %v616, %v625
      %v628 = vmul.f32 %v626, %v626
      %v629 = vmul.f32 %v627, %v627
      %v630 = vsel %vm618, %v628, 0.0
      %v631 = vsel %vm618, %v629, 0.0
      %v632 = vadd.f32 %v630, %v631
      %633 = vadd.xlane.f32.xlu0 %v632
      %v634 = vpop.xlane.xlu0 %633
      %v635 = vmul.f32 %v634, %v624
      %v636 = vadd.f32 %v635, 1e-05
      %v637 = vrsqrt.pop %v636
      %v638 = vmul.f32 %v626, %v637
      %v639 = vmul.f32 %v627, %v637
      %vm640 = vcmp.ge.f32.partialorder %v638, 0.0
      %vm641 = vcmp.ge.f32.partialorder %v639, 0.0
      %v642 = vmul.f32 %v638, 0.1
      %v643 = vmul.f32 %v639, 0.1
      %v644 = vsel %vm640, %v638, %v642
      %v645 = vsel %vm641, %v639, %v643
      %v648 = vcombine.low %v644, %v645
      %650 = vst [vmem:[#allocation2 + $0x4] sm:$0x33] %v648
      %v651 = vld [vmem:[#allocation2] sm:$0x33]
      %v652 = vld [vmem:[#allocation2 + $0x8] sm:$0x3]
      %v655 = vcombine.high %v651, %v651
      %656 = vrot.lane.b32.xlu0 %v651, 17
      %v657 = vpop.permute.xlu0 %656
      %658 = vrot.lane.b32.xlu0 %v655, 17
      %v659 = vpop.permute.xlu0 %658
      %660 = vrot.lane.b32.xlu0 %v652, 17
      %v661 = vpop.permute.xlu0 %660
      %v662 = vsel %vm356, %v657, %v659
      %v663 = vsel %vm356, %v659, %v661
      %v666 = vsel %vm345, %v662, 0.0
      %v667 = vsel %vm346, %v663, 0.0
      %668 = vst [vmem:[#allocation3] sm:$0x3] %v666
      %669 = vst [vmem:[#allocation3 + $0x8] sm:$0x3] %v667
      %v670 = vld [vmem:[#allocation2] sm:$0x33]
      %v671 = vld [vmem:[#allocation2 + $0x8] sm:$0x3]
      %v674 = vcombine.high %v670, %v670
      %v675 = vrot.slane %v670, 6
      %v676 = vrot.slane %v674, 6
      %v677 = vrot.slane %v671, 6
      %678 = vrot.lane.b32.xlu0 %v675, 16
      %v679 = vpop.permute.xlu0 %678
      %680 = vrot.lane.b32.xlu0 %v676, 16
      %v681 = vpop.permute.xlu0 %680
      %682 = vrot.lane.b32.xlu0 %v677, 16
      %v683 = vpop.permute.xlu0 %682
      %v684 = vsel %vm377, %v679, %v681
      %v685 = vsel %vm377, %v681, %v683
      %688 = vst [vmem:[#allocation3] sm:$0xc] %v684
      %689 = vst [vmem:[#allocation3 + $0x8] sm:$0xc] %v685
      %v690 = vld [vmem:[#allocation2] sm:$0x33]
      %v691 = vld [vmem:[#allocation2 + $0x8] sm:$0x3]
      %v694 = vcombine.high %v690, %v690
      %695 = vrot.lane.b32.xlu0 %v690, 15
      %v696 = vpop.permute.xlu0 %695
      %697 = vrot.lane.b32.xlu0 %v694, 15
      %v698 = vpop.permute.xlu0 %697
      %699 = vrot.lane.b32.xlu0 %v691, 15
      %v700 = vpop.permute.xlu0 %699
      %v701 = vsel %vm399, %v696, %v698
      %v702 = vsel %vm399, %v698, %v700
      %v705 = vsel %vm388, %v701, 0.0
      %v706 = vsel %vm389, %v702, 0.0
      %v709 = vrot.slane %v705, 4
      %v710 = vrot.slane %v706, 4
      %713 = vst [vmem:[#allocation3] sm:$0x30] %v709
      %714 = vst [vmem:[#allocation3 + $0x8] sm:$0x30] %v710
      %v715 = vld [vmem:[#allocation2] sm:$0x33]
      %v716 = vld [vmem:[#allocation2 + $0x8] sm:$0x3]
      %v719 = vcombine.high %v715, %v715
      %720 = vrot.lane.b32.xlu0 %v715, 1
      %v721 = vpop.permute.xlu0 %720
      %722 = vrot.lane.b32.xlu0 %v719, 1
      %v723 = vpop.permute.xlu0 %722
      %724 = vrot.lane.b32.xlu0 %v716, 1
      %v725 = vpop.permute.xlu0 %724
      %v726 = vsel %vm419, %v721, %v723
      %v727 = vsel %vm419, %v723, %v725
      %v730 = vsel %vm345, %v726, 0.0
      %v731 = vsel %vm346, %v727, 0.0
      %v734 = vrot.slane %v730, 2
      %v735 = vrot.slane %v731, 2
      %738 = vst [vmem:[#allocation3] sm:$0xc0] %v734
      %739 = vst [vmem:[#allocation3 + $0x8] sm:$0xc0] %v735
      %v740 = vld [vmem:[#allocation2 + $0x4] sm:$0x33]
      %v742 = vcombine.high %v740, %v740
      %744 = vst [vmem:[#allocation3 + $0x10] sm:$0x3] %v740
      %745 = vst [vmem:[#allocation3 + $0x18] sm:$0x3] %v742
      %v746 = vld [vmem:[#allocation2 + $0x4] sm:$0x33]
      %v747 = vld [vmem:[#allocation2 + $0xc] sm:$0x3]
      %v750 = vcombine.high %v746, %v746
      %751 = vrot.lane.b32.xlu0 %v746, 127
      %v752 = vpop.permute.xlu0 %751
      %753 = vrot.lane.b32.xlu0 %v750, 127
      %v754 = vpop.permute.xlu0 %753
      %755 = vrot.lane.b32.xlu0 %v747, 127
      %v756 = vpop.permute.xlu0 %755
      %v757 = vsel %vm451, %v752, %v754
      %v758 = vsel %vm451, %v754, %v756
      %v761 = vsel %vm388, %v757, 0.0
      %v762 = vsel %vm389, %v758, 0.0
      %v765 = vrot.slane %v761, 6
      %v766 = vrot.slane %v762, 6
      %769 = vst [vmem:[#allocation3 + $0x10] sm:$0xc] %v765
      %770 = vst [vmem:[#allocation3 + $0x18] sm:$0xc] %v766
      %v771 = vld [vmem:[#allocation2 + $0x4] sm:$0x33]
      %v772 = vld [vmem:[#allocation2 + $0xc] sm:$0x3]
      %v775 = vcombine.high %v771, %v771
      %776 = vrot.lane.b32.xlu0 %v771, 113
      %v777 = vpop.permute.xlu0 %776
      %778 = vrot.lane.b32.xlu0 %v775, 113
      %v779 = vpop.permute.xlu0 %778
      %780 = vrot.lane.b32.xlu0 %v772, 113
      %v781 = vpop.permute.xlu0 %780
      %v782 = vsel %vm477, %v777, %v779
      %v783 = vsel %vm477, %v779, %v781
      %v786 = vsel %vm345, %v782, 0.0
      %v787 = vsel %vm346, %v783, 0.0
      %v790 = vrot.slane %v786, 4
      %v791 = vrot.slane %v787, 4
      %794 = vst [vmem:[#allocation3 + $0x10] sm:$0x30] %v790
      %795 = vst [vmem:[#allocation3 + $0x18] sm:$0x30] %v791
      %v796 = vld [vmem:[#allocation2 + $0x4] sm:$0x33]
      %v797 = vld [vmem:[#allocation2 + $0xc] sm:$0x3]
      %v800 = vcombine.high %v796, %v796
      %v801 = vrot.slane %v796, 2
      %v802 = vrot.slane %v800, 2
      %v803 = vrot.slane %v797, 2
      %804 = vrot.lane.b32.xlu0 %v801, 112
      %v805 = vpop.permute.xlu0 %804
      %806 = vrot.lane.b32.xlu0 %v802, 112
      %v807 = vpop.permute.xlu0 %806
      %808 = vrot.lane.b32.xlu0 %v803, 112
      %v809 = vpop.permute.xlu0 %808
      %v810 = vsel %vm498, %v805, %v807
      %v811 = vsel %vm498, %v807, %v809
      %814 = vst [vmem:[#allocation3 + $0x10] sm:$0xc0] %v810
      %815 = vst [vmem:[#allocation3 + $0x18] sm:$0xc0] %v811
      %v816 = vld [vmem:[#allocation2 + $0x4] sm:$0x33]
      %v817 = vld [vmem:[#allocation2 + $0xc] sm:$0x3]
      %v820 = vcombine.high %v816, %v816
      %821 = vrot.lane.b32.xlu0 %v816, 111
      %v822 = vpop.permute.xlu0 %821
      %823 = vrot.lane.b32.xlu0 %v820, 111
      %v824 = vpop.permute.xlu0 %823
      %825 = vrot.lane.b32.xlu0 %v817, 111
      %v826 = vpop.permute.xlu0 %825
      %v827 = vsel %vm516, %v822, %v824
      %v828 = vsel %vm516, %v824, %v826
      %v831 = vsel %vm388, %v827, 0.0
      %v832 = vsel %vm389, %v828, 0.0
      %833 = vst [vmem:[#allocation3 + $0x20] sm:$0x3] %v831
      %834 = vst [vmem:[#allocation3 + $0x28] sm:$0x3] %v832
      %v835 = vld [vmem:[%s2] sm:$0xf]
      %v836 = vld [vmem:[#allocation3] sm:$0xff]
      %v837 = vld [vmem:[#allocation3 + $0x8] sm:$0xff]
      %v838 = vld [vmem:[#allocation3 + $0x10] sm:$0xff]
      %v839 = vld [vmem:[#allocation3 + $0x18] sm:$0xff]
      %v840 = vld [vmem:[#allocation3 + $0x20] sm:$0x3]
      %v841 = vld [vmem:[#allocation3 + $0x28] sm:$0x3]
      %vm842 = vcmask 146432
      %v844 = vsel %vm842, %v835, 0
      %v847 = vsel %vm618, %v840, 0
      %v850 = vsel %vm618, %v841, 0
      %852 = vmatprep.subr.mxu0 0.0
      %853 = vmatpush1.msra.mxu0 0.0
      %854 = vmatprep.subr.mxu0 0.0
      %855 = vmatpush1.msra.mxu0 0.0
      %856 = vmatprep.subr.mxu0 0.0
      %857 = vmatpush1.msra.mxu0 0.0
      %858 = vmatprep.subr.mxu0 0.0
      %859 = vmatpush1.msra.mxu0 0.0
      %860 = vmatprep.subr.mxu0 0.0
      %861 = vmatpush1.msra.mxu0 0.0
      %862 = vmatprep.subr.mxu0 0.0
      %863 = vmatpush1.msra.mxu0 0.0
      %864 = vmatprep.subr.mxu0 0.0
      %865 = vmatpush1.msra.mxu0 0.0
      %866 = vmatprep.subr.mxu0 0.0
      %867 = vmatpush1.msra.mxu0 0.0
      %868 = vmatprep.subr.mxu0 0.0
      %869 = vmatpush1.msra.mxu0 0.0
      %870 = vmatprep.subr.mxu0 0.0
      %871 = vmatpush1.msra.mxu0 0.0
      %872 = vmatprep.subr.mxu0 0.0
      %873 = vmatpush1.msra.mxu0 0.0
      %874 = vmatprep.subr.mxu0 0.0
      %875 = vmatpush1.msra.mxu0 0.0
      %876 = vmatprep.subr.mxu0 0.0
      %877 = vmatpush1.msra.mxu0 0.0
      %878 = vmatprep.subr.mxu0 %v850
      %879 = vmatpush1.msra.mxu0 %v847
      %880 = vmatprep.subr.mxu0 %v839
      %881 = vmatpush1.msra.mxu0 %v838
      %882 = vmatprep.subr.mxu0 %v837
      %883 = vmatpush1.msra.mxu0 %v836
      %884 = vmatprep.subr.mxu0 0.0
      %885 = vmatpush2.msra.mxu0 0.0
      %886 = vmatprep.subr.mxu0 0.0
      %887 = vmatpush2.msra.mxu0 0.0
      %888 = vmatprep.subr.mxu0 0.0
      %889 = vmatpush2.msra.mxu0 0.0
      %890 = vmatprep.subr.mxu0 0.0
      %891 = vmatpush2.msra.mxu0 0.0
      %892 = vmatprep.subr.mxu0 0.0
      %893 = vmatpush2.msra.mxu0 0.0
      %894 = vmatprep.subr.mxu0 0.0
      %895 = vmatpush2.msra.mxu0 0.0
      %896 = vmatprep.subr.mxu0 0.0
      %897 = vmatpush2.msra.mxu0 0.0
      %898 = vmatprep.subr.mxu0 0.0
      %899 = vmatpush2.msra.mxu0 0.0
      %900 = vmatprep.subr.mxu0 0.0
      %901 = vmatpush2.msra.mxu0 0.0
      %902 = vmatprep.subr.mxu0 0.0
      %903 = vmatpush2.msra.mxu0 0.0
      %904 = vmatprep.subr.mxu0 0.0
      %905 = vmatpush2.msra.mxu0 0.0
      %906 = vmatprep.subr.mxu0 0.0
      %907 = vmatpush2.msra.mxu0 0.0
      %908 = vmatprep.subr.mxu0 0.0
      %909 = vmatpush2.msra.mxu0 0.0
      %910 = vmatprep.subr.mxu0 0.0
      %911 = vmatpush2.msra.mxu0 0.0
      %912 = vmatprep.subr.mxu0 0.0
      %913 = vmatpush2.msra.mxu0 0.0
      %914 = vmatprep.subr.mxu0 0.0
      %915 = vmatpush2.msra.mxu0 0.0
      %916 = vmatprep.mubr.f32.mxu0 0.0
      %917 = vmatmul.mubr.f32.gmra.mxu0 %v844
      %v918 = vpop.f32.mrf.mxu0
      %v919 = vadd.f32 0.0, %v918
      %v920 = vpop.f32.mrf.mxu0
      %v921 = vadd.f32 0.0, %v920
      %922 = vdwg.mxu0
      %v923 = vsel %vm540, %v919, 0.0
      %v924 = vsel %vm540, %v921, 0.0
      %v925 = vadd.f32 %v923, %v924
      %926 = vadd.xlane.f32.xlu0 %v925
      %v927 = vpop.xlane.xlu0 %926
      %v928 = vmul.f32 %v927, %v624
      %v929 = vsub.f32 %v919, %v928
      %v930 = vsub.f32 %v921, %v928
      %v931 = vmul.f32 %v929, %v929
      %v932 = vmul.f32 %v930, %v930
      %v933 = vsel %vm540, %v931, 0.0
      %v934 = vsel %vm540, %v932, 0.0
      %v935 = vadd.f32 %v933, %v934
      %936 = vadd.xlane.f32.xlu0 %v935
      %v937 = vpop.xlane.xlu0 %936
      %v938 = vmul.f32 %v937, %v624
      %v939 = vadd.f32 %v938, 1e-05
      %v940 = vrsqrt.pop %v939
      %v941 = vmul.f32 %v929, %v940
      %v942 = vmul.f32 %v930, %v940
      %vm943 = vcmp.ge.f32.partialorder %v941, 0.0
      %vm944 = vcmp.ge.f32.partialorder %v942, 0.0
      %v945 = vmul.f32 %v941, 0.1
      %v946 = vmul.f32 %v942, 0.1
      %v947 = vsel %vm943, %v941, %v945
      %v948 = vsel %vm944, %v942, %v946
      %v951 = vcombine.low %v947, %v948
      %953 = vst [vmem:[#allocation2 + $0x4] sm:$0xff] %v951
      %v954 = vld [vmem:[#allocation2] sm:$0xff]
      %v955 = vld [vmem:[#allocation2 + $0x8] sm:$0xf]
      %v958 = vcombine.high %v954, %v954
      %959 = vrot.lane.b32.xlu0 %v954, 17
      %v960 = vpop.permute.xlu0 %959
      %961 = vrot.lane.b32.xlu0 %v958, 17
      %v962 = vpop.permute.xlu0 %961
      %963 = vrot.lane.b32.xlu0 %v955, 17
      %v964 = vpop.permute.xlu0 %963
      %v965 = vsel %vm356, %v960, %v962
      %v966 = vsel %vm356, %v962, %v964
      %v969 = vsel %vm345, %v965, 0.0
      %v970 = vsel %vm346, %v966, 0.0
      %971 = vst [vmem:[#allocation3] sm:$0xf] %v969
      %972 = vst [vmem:[#allocation3 + $0x8] sm:$0xf] %v970
      %v973 = vld [vmem:[#allocation2] sm:$0xff]
      %v974 = vld [vmem:[#allocation2 + $0x8] sm:$0xf]
      %v977 = vcombine.low %v973, %v973
      %v978 = vcombine.low %v974, %v974
      %979 = vrot.lane.b32.xlu0 %v977, 16
      %v980 = vpop.permute.xlu0 %979
      %981 = vrot.lane.b32.xlu0 %v973, 16
      %v982 = vpop.permute.xlu0 %981
      %983 = vrot.lane.b32.xlu0 %v978, 16
      %v984 = vpop.permute.xlu0 %983
      %v985 = vsel %vm377, %v980, %v982
      %v986 = vsel %vm377, %v982, %v984
      %989 = vst [vmem:[#allocation3] sm:$0xf0] %v985
      %990 = vst [vmem:[#allocation3 + $0x8] sm:$0xf0] %v986
      %v991 = vld [vmem:[#allocation2] sm:$0xff]
      %v992 = vld [vmem:[#allocation2 + $0x8] sm:$0xf]
      %v995 = vcombine.high %v991, %v991
      %996 = vrot.lane.b32.xlu0 %v991, 15
      %v997 = vpop.permute.xlu0 %996
      %998 = vrot.lane.b32.xlu0 %v995, 15
      %v999 = vpop.permute.xlu0 %998
      %1000 = vrot.lane.b32.xlu0 %v992, 15
      %v1001 = vpop.permute.xlu0 %1000
      %v1002 = vsel %vm399, %v997, %v999
      %v1003 = vsel %vm399, %v999, %v1001
      %v1006 = vsel %vm388, %v1002, 0.0
      %v1007 = vsel %vm389, %v1003, 0.0
      %1008 = vst [vmem:[#allocation3 + $0x10] sm:$0xf] %v1006
      %1009 = vst [vmem:[#allocation3 + $0x18] sm:$0xf] %v1007
      %v1010 = vld [vmem:[#allocation2] sm:$0xff]
      %v1011 = vld [vmem:[#allocation2 + $0x8] sm:$0xf]
      %v1014 = vcombine.high %v1010, %v1010
      %1015 = vrot.lane.b32.xlu0 %v1010, 1
      %v1016 = vpop.permute.xlu0 %1015
      %1017 = vrot.lane.b32.xlu0 %v1014, 1
      %v1018 = vpop.permute.xlu0 %1017
      %1019 = vrot.lane.b32.xlu0 %v1011, 1
      %v1020 = vpop.permute.xlu0 %1019
      %v1021 = vsel %vm419, %v1016, %v1018
      %v1022 = vsel %vm419, %v1018, %v1020
      %v1025 = vsel %vm345, %v1021, 0.0
      %v1026 = vsel %vm346, %v1022, 0.0
      %v1029 = vrot.slane %v1025, 4
      %v1030 = vrot.slane %v1026, 4
      %1033 = vst [vmem:[#allocation3 + $0x10] sm:$0xf0] %v1029
      %1034 = vst [vmem:[#allocation3 + $0x18] sm:$0xf0] %v1030
      %v1035 = vld [vmem:[#allocation2 + $0x4] sm:$0xff]
      %v1037 = vcombine.high %v1035, %v1035
      %1039 = vst [vmem:[#allocation3 + $0x20] sm:$0xf] %v1035
      %1040 = vst [vmem:[#allocation3 + $0x28] sm:$0xf] %v1037
      %v1041 = vld [vmem:[#allocation2 + $0x4] sm:$0xff]
      %v1042 = vld [vmem:[#allocation2 + $0xc] sm:$0xf]
      %v1045 = vcombine.high %v1041, %v1041
      %1046 = vrot.lane.b32.xlu0 %v1041, 127
      %v1047 = vpop.permute.xlu0 %1046
      %1048 = vrot.lane.b32.xlu0 %v1045, 127
      %v1049 = vpop.permute.xlu0 %1048
      %1050 = vrot.lane.b32.xlu0 %v1042, 127
      %v1051 = vpop.permute.xlu0 %1050
      %v1052 = vsel %vm451, %v1047, %v1049
      %v1053 = vsel %vm451, %v1049, %v1051
      %v1056 = vsel %vm388, %v1052, 0.0
      %v1057 = vsel %vm389, %v1053, 0.0
      %v1060 = vrot.slane %v1056, 4
      %v1061 = vrot.slane %v1057, 4
      %1064 = vst [vmem:[#allocation3 + $0x20] sm:$0xf0] %v1060
      %1065 = vst [vmem:[#allocation3 + $0x28] sm:$0xf0] %v1061
      %v1066 = vld [vmem:[#allocation2 + $0x4] sm:$0xff]
      %v1067 = vld [vmem:[#allocation2 + $0xc] sm:$0xf]
      %v1070 = vcombine.high %v1066, %v1066
      %1071 = vrot.lane.b32.xlu0 %v1066, 113
      %v1072 = vpop.permute.xlu0 %1071
      %1073 = vrot.lane.b32.xlu0 %v1070, 113
      %v1074 = vpop.permute.xlu0 %1073
      %1075 = vrot.lane.b32.xlu0 %v1067, 113
      %v1076 = vpop.permute.xlu0 %1075
      %v1077 = vsel %vm477, %v1072, %v1074
      %v1078 = vsel %vm477, %v1074, %v1076
      %v1081 = vsel %vm345, %v1077, 0.0
      %v1082 = vsel %vm346, %v1078, 0.0
      %1083 = vst [vmem:[#allocation3 + $0x30] sm:$0xf] %v1081
      %1084 = vst [vmem:[#allocation3 + $0x38] sm:$0xf] %v1082
      %v1085 = vld [vmem:[#allocation2 + $0x4] sm:$0xff]
      %v1086 = vld [vmem:[#allocation2 + $0xc] sm:$0xf]
      %v1089 = vcombine.low %v1085, %v1085
      %v1090 = vcombine.low %v1086, %v1086
      %1091 = vrot.lane.b32.xlu0 %v1089, 112
      %v1092 = vpop.permute.xlu0 %1091
      %1093 = vrot.lane.b32.xlu0 %v1085, 112
      %v1094 = vpop.permute.xlu0 %1093
      %1095 = vrot.lane.b32.xlu0 %v1090, 112
      %v1096 = vpop.permute.xlu0 %1095
      %v1097 = vsel %vm498, %v1092, %v1094
      %v1098 = vsel %vm498, %v1094, %v1096
      %1101 = vst [vmem:[#allocation3 + $0x30] sm:$0xf0] %v1097
      %1102 = vst [vmem:[#allocation3 + $0x38] sm:$0xf0] %v1098
      %v1103 = vld [vmem:[#allocation2 + $0x4] sm:$0xff]
      %v1104 = vld [vmem:[#allocation2 + $0xc] sm:$0xf]
      %v1107 = vcombine.high %v1103, %v1103
      %1108 = vrot.lane.b32.xlu0 %v1103, 111
      %v1109 = vpop.permute.xlu0 %1108
      %1110 = vrot.lane.b32.xlu0 %v1107, 111
      %v1111 = vpop.permute.xlu0 %1110
      %1112 = vrot.lane.b32.xlu0 %v1104, 111
      %v1113 = vpop.permute.xlu0 %1112
      %v1114 = vsel %vm516, %v1109, %v1111
      %v1115 = vsel %vm516, %v1111, %v1113
      %v1118 = vsel %vm388, %v1114, 0.0
      %v1119 = vsel %vm389, %v1115, 0.0
      %1120 = vst [vmem:[#allocation3 + $0x40] sm:$0xf] %v1118
      %1121 = vst [vmem:[#allocation3 + $0x48] sm:$0xf] %v1119
      %v1122 = vld [vmem:[%s3] sm:$0x3f]
      %v1123 = vld [vmem:[#allocation3] sm:$0xff]
      %v1124 = vld [vmem:[#allocation3 + $0x8] sm:$0xff]
      %v1125 = vld [vmem:[#allocation3 + $0x10] sm:$0xff]
      %v1126 = vld [vmem:[#allocation3 + $0x18] sm:$0xff]
      %v1127 = vld [vmem:[#allocation3 + $0x20] sm:$0xff]
      %v1128 = vld [vmem:[#allocation3 + $0x28] sm:$0xff]
      %v1129 = vld [vmem:[#allocation3 + $0x30] sm:$0xff]
      %v1130 = vld [vmem:[#allocation3 + $0x38] sm:$0xff]
      %v1131 = vld [vmem:[#allocation3 + $0x40] sm:$0xf]
      %v1132 = vld [vmem:[#allocation3 + $0x48] sm:$0xf]
      %v1134 = vsel %vm536, %v1122, 0
      %v1137 = vsel %vm540, %v1131, 0
      %v1140 = vsel %vm540, %v1132, 0
      %1142 = vmatprep.subr.mxu0 0.0
      %1143 = vmatpush1.msra.mxu0 0.0
      %1144 = vmatprep.subr.mxu0 0.0
      %1145 = vmatpush1.msra.mxu0 0.0
      %1146 = vmatprep.subr.mxu0 0.0
      %1147 = vmatpush1.msra.mxu0 0.0
      %1148 = vmatprep.subr.mxu0 0.0
      %1149 = vmatpush1.msra.mxu0 0.0
      %1150 = vmatprep.subr.mxu0 0.0
      %1151 = vmatpush1.msra.mxu0 0.0
      %1152 = vmatprep.subr.mxu0 0.0
      %1153 = vmatpush1.msra.mxu0 0.0
      %1154 = vmatprep.subr.mxu0 0.0
      %1155 = vmatpush1.msra.mxu0 0.0
      %1156 = vmatprep.subr.mxu0 0.0
      %1157 = vmatpush1.msra.mxu0 0.0
      %1158 = vmatprep.subr.mxu0 0.0
      %1159 = vmatpush1.msra.mxu0 0.0
      %1160 = vmatprep.subr.mxu0 0.0
      %1161 = vmatpush1.msra.mxu0 0.0
      %1162 = vmatprep.subr.mxu0 0.0
      %1163 = vmatpush1.msra.mxu0 0.0
      %1164 = vmatprep.subr.mxu0 %v1140
      %1165 = vmatpush1.msra.mxu0 %v1137
      %1166 = vmatprep.subr.mxu0 %v1130
      %1167 = vmatpush1.msra.mxu0 %v1129
      %1168 = vmatprep.subr.mxu0 %v1128
      %1169 = vmatpush1.msra.mxu0 %v1127
      %1170 = vmatprep.subr.mxu0 %v1126
      %1171 = vmatpush1.msra.mxu0 %v1125
      %1172 = vmatprep.subr.mxu0 %v1124
      %1173 = vmatpush1.msra.mxu0 %v1123
      %1174 = vmatprep.subr.mxu0 0.0
      %1175 = vmatpush2.msra.mxu0 0.0
      %1176 = vmatprep.subr.mxu0 0.0
      %1177 = vmatpush2.msra.mxu0 0.0
      %1178 = vmatprep.subr.mxu0 0.0
      %1179 = vmatpush2.msra.mxu0 0.0
      %1180 = vmatprep.subr.mxu0 0.0
      %1181 = vmatpush2.msra.mxu0 0.0
      %1182 = vmatprep.subr.mxu0 0.0
      %1183 = vmatpush2.msra.mxu0 0.0
      %1184 = vmatprep.subr.mxu0 0.0
      %1185 = vmatpush2.msra.mxu0 0.0
      %1186 = vmatprep.subr.mxu0 0.0
      %1187 = vmatpush2.msra.mxu0 0.0
      %1188 = vmatprep.subr.mxu0 0.0
      %1189 = vmatpush2.msra.mxu0 0.0
      %1190 = vmatprep.subr.mxu0 0.0
      %1191 = vmatpush2.msra.mxu0 0.0
      %1192 = vmatprep.subr.mxu0 0.0
      %1193 = vmatpush2.msra.mxu0 0.0
      %1194 = vmatprep.subr.mxu0 0.0
      %1195 = vmatpush2.msra.mxu0 0.0
      %1196 = vmatprep.subr.mxu0 0.0
      %1197 = vmatpush2.msra.mxu0 0.0
      %1198 = vmatprep.subr.mxu0 0.0
      %1199 = vmatpush2.msra.mxu0 0.0
      %1200 = vmatprep.subr.mxu0 0.0
      %1201 = vmatpush2.msra.mxu0 0.0
      %1202 = vmatprep.subr.mxu0 0.0
      %1203 = vmatpush2.msra.mxu0 0.0
      %1204 = vmatprep.subr.mxu0 0.0
      %1205 = vmatpush2.msra.mxu0 0.0
      %1206 = vmatprep.mubr.f32.mxu0 0.0
      %1207 = vmatmul.mubr.f32.gmra.mxu0 %v1134
      %v1208 = vpop.f32.mrf.mxu0
      %v1209 = vadd.f32 0.0, %v1208
      %v1210 = vpop.f32.mrf.mxu0
      %v1211 = vadd.f32 0.0, %v1210
      %1212 = vdwg.mxu0
      %vm1213 = vcmask 1045504
      %v1214 = vsel %vm1213, %v1209, 0.0
      %v1215 = vsel %vm1213, %v1211, 0.0
      %v1216 = vadd.f32 %v1214, %v1215
      %1217 = vadd.xlane.f32.xlu0 %v1216
      %v1218 = vpop.xlane.xlu0 %1217
      %v1219 = vmul.f32 %v1218, %v624
      %v1220 = vsub.f32 %v1209, %v1219
      %v1221 = vsub.f32 %v1211, %v1219
      %v1222 = vmul.f32 %v1220, %v1220
      %v1223 = vmul.f32 %v1221, %v1221
      %v1224 = vsel %vm1213, %v1222, 0.0
      %v1225 = vsel %vm1213, %v1223, 0.0
      %v1226 = vadd.f32 %v1224, %v1225
      %1227 = vadd.xlane.f32.xlu0 %v1226
      %v1228 = vpop.xlane.xlu0 %1227
      %v1229 = vmul.f32 %v1228, %v624
      %v1230 = vadd.f32 %v1229, 1e-05
      %v1231 = vrsqrt.pop %v1230
      %v1232 = vmul.f32 %v1220, %v1231
      %v1233 = vmul.f32 %v1221, %v1231
      %vm1234 = vcmp.ge.f32.partialorder %v1232, 0.0
      %vm1235 = vcmp.ge.f32.partialorder %v1233, 0.0
      %v1236 = vmul.f32 %v1232, 0.1
      %v1237 = vmul.f32 %v1233, 0.1
      %v1238 = vsel %vm1234, %v1232, %v1236
      %v1239 = vsel %vm1235, %v1233, %v1237
      %v1240 = vld [vmem:[%s4] sm:$0xff]
      %v1241 = vld [vmem:[%s5] sm:$0xff]
      %vm1242 = vcmask 31744
      %v1244 = vsel %vm1242, %v1241, 0
      %v1246 = vsel %vm540, %v947, 0
      %v1248 = vsel %vm540, %v948, 0
      %1250 = vmatprep.subr.mxu0 0.0
      %1251 = vmatpush1.msra.mxu0 0.0
      %1252 = vmatprep.subr.mxu0 0.0
      %1253 = vmatpush1.msra.mxu0 0.0
      %1254 = vmatprep.subr.mxu0 0.0
      %1255 = vmatpush1.msra.mxu0 0.0
      %1256 = vmatprep.subr.mxu0 0.0
      %1257 = vmatpush1.msra.mxu0 0.0
      %1258 = vmatprep.subr.mxu0 0.0
      %1259 = vmatpush1.msra.mxu0 0.0
      %1260 = vmatprep.subr.mxu0 0.0
      %1261 = vmatpush1.msra.mxu0 0.0
      %1262 = vmatprep.subr.mxu0 0.0
      %1263 = vmatpush1.msra.mxu0 0.0
      %1264 = vmatprep.subr.mxu0 0.0
      %1265 = vmatpush1.msra.mxu0 0.0
      %1266 = vmatprep.subr.mxu0 0.0
      %1267 = vmatpush1.msra.mxu0 0.0
      %1268 = vmatprep.subr.mxu0 0.0
      %1269 = vmatpush1.msra.mxu0 0.0
      %1270 = vmatprep.subr.mxu0 0.0
      %1271 = vmatpush1.msra.mxu0 0.0
      %1272 = vmatprep.subr.mxu0 0.0
      %1273 = vmatpush1.msra.mxu0 0.0
      %1274 = vmatprep.subr.mxu0 0.0
      %1275 = vmatpush1.msra.mxu0 0.0
      %1276 = vmatprep.subr.mxu0 0.0
      %1277 = vmatpush1.msra.mxu0 0.0
      %1278 = vmatprep.subr.mxu0 0.0
      %1279 = vmatpush1.msra.mxu0 0.0
      %1280 = vmatprep.subr.mxu0 %v1248
      %1281 = vmatpush1.msra.mxu0 %v1246
      %1282 = vmatprep.subr.mxu0 0.0
      %1283 = vmatpush2.msra.mxu0 0.0
      %1284 = vmatprep.subr.mxu0 0.0
      %1285 = vmatpush2.msra.mxu0 0.0
      %1286 = vmatprep.subr.mxu0 0.0
      %1287 = vmatpush2.msra.mxu0 0.0
      %1288 = vmatprep.subr.mxu0 0.0
      %1289 = vmatpush2.msra.mxu0 0.0
      %1290 = vmatprep.subr.mxu0 0.0
      %1291 = vmatpush2.msra.mxu0 0.0
      %1292 = vmatprep.subr.mxu0 0.0
      %1293 = vmatpush2.msra.mxu0 0.0
      %1294 = vmatprep.subr.mxu0 0.0
      %1295 = vmatpush2.msra.mxu0 0.0
      %1296 = vmatprep.subr.mxu0 0.0
      %1297 = vmatpush2.msra.mxu0 0.0
      %1298 = vmatprep.subr.mxu0 0.0
      %1299 = vmatpush2.msra.mxu0 0.0
      %1300 = vmatprep.subr.mxu0 0.0
      %1301 = vmatpush2.msra.mxu0 0.0
      %1302 = vmatprep.subr.mxu0 0.0
      %1303 = vmatpush2.msra.mxu0 0.0
      %1304 = vmatprep.subr.mxu0 0.0
      %1305 = vmatpush2.msra.mxu0 0.0
      %1306 = vmatprep.subr.mxu0 0.0
      %1307 = vmatpush2.msra.mxu0 0.0
      %1308 = vmatprep.subr.mxu0 0.0
      %1309 = vmatpush2.msra.mxu0 0.0
      %1310 = vmatprep.subr.mxu0 0.0
      %1311 = vmatpush2.msra.mxu0 0.0
      %1312 = vmatprep.subr.mxu0 0.0
      %1313 = vmatpush2.msra.mxu0 0.0
      %1314 = vmatprep.mubr.f32.mxu0 0.0
      %1315 = vmatmul.mubr.f32.gmra.mxu0 %v1244
      %v1316 = vpop.f32.mrf.mxu0
      %v1317 = vadd.f32 0.0, %v1316
      %v1318 = vpop.f32.mrf.mxu0
      %v1319 = vadd.f32 0.0, %v1318
      %1320 = vdwg.mxu0
      %vm1321 = vcmask 15360
      %v1323 = vsel %vm1321, %v1240, 0
      %v1325 = vsel %vm618, %v644, 0
      %v1327 = vsel %vm618, %v645, 0
      %1329 = vmatprep.subr.mxu0 0.0
      %1330 = vmatpush1.msra.mxu0 0.0
      %1331 = vmatprep.subr.mxu0 0.0
      %1332 = vmatpush1.msra.mxu0 0.0
      %1333 = vmatprep.subr.mxu0 0.0
      %1334 = vmatpush1.msra.mxu0 0.0
      %1335 = vmatprep.subr.mxu0 0.0
      %1336 = vmatpush1.msra.mxu0 0.0
      %1337 = vmatprep.subr.mxu0 0.0
      %1338 = vmatpush1.msra.mxu0 0.0
      %1339 = vmatprep.subr.mxu0 0.0
      %1340 = vmatpush1.msra.mxu0 0.0
      %1341 = vmatprep.subr.mxu0 0.0
      %1342 = vmatpush1.msra.mxu0 0.0
      %1343 = vmatprep.subr.mxu0 0.0
      %1344 = vmatpush1.msra.mxu0 0.0
      %1345 = vmatprep.subr.mxu0 0.0
      %1346 = vmatpush1.msra.mxu0 0.0
      %1347 = vmatprep.subr.mxu0 0.0
      %1348 = vmatpush1.msra.mxu0 0.0
      %1349 = vmatprep.subr.mxu0 0.0
      %1350 = vmatpush1.msra.mxu0 0.0
      %1351 = vmatprep.subr.mxu0 0.0
      %1352 = vmatpush1.msra.mxu0 0.0
      %1353 = vmatprep.subr.mxu0 0.0
      %1354 = vmatpush1.msra.mxu0 0.0
      %1355 = vmatprep.subr.mxu0 0.0
      %1356 = vmatpush1.msra.mxu0 0.0
      %1357 = vmatprep.subr.mxu0 0.0
      %1358 = vmatpush1.msra.mxu0 0.0
      %1359 = vmatprep.subr.mxu0 %v1327
      %1360 = vmatpush1.msra.mxu0 %v1325
      %1361 = vmatprep.subr.mxu0 0.0
      %1362 = vmatpush2.msra.mxu0 0.0
      %1363 = vmatprep.subr.mxu0 0.0
      %1364 = vmatpush2.msra.mxu0 0.0
      %1365 = vmatprep.subr.mxu0 0.0
      %1366 = vmatpush2.msra.mxu0 0.0
      %1367 = vmatprep.subr.mxu0 0.0
      %1368 = vmatpush2.msra.mxu0 0.0
      %1369 = vmatprep.subr.mxu0 0.0
      %1370 = vmatpush2.msra.mxu0 0.0
      %1371 = vmatprep.subr.mxu0 0.0
      %1372 = vmatpush2.msra.mxu0 0.0
      %1373 = vmatprep.subr.mxu0 0.0
      %1374 = vmatpush2.msra.mxu0 0.0
      %1375 = vmatprep.subr.mxu0 0.0
      %1376 = vmatpush2.msra.mxu0 0.0
      %1377 = vmatprep.subr.mxu0 0.0
      %1378 = vmatpush2.msra.mxu0 0.0
      %1379 = vmatprep.subr.mxu0 0.0
      %1380 = vmatpush2.msra.mxu0 0.0
      %1381 = vmatprep.subr.mxu0 0.0
      %1382 = vmatpush2.msra.mxu0 0.0
      %1383 = vmatprep.subr.mxu0 0.0
      %1384 = vmatpush2.msra.mxu0 0.0
      %1385 = vmatprep.subr.mxu0 0.0
      %1386 = vmatpush2.msra.mxu0 0.0
      %1387 = vmatprep.subr.mxu0 0.0
      %1388 = vmatpush2.msra.mxu0 0.0
      %1389 = vmatprep.subr.mxu0 0.0
      %1390 = vmatpush2.msra.mxu0 0.0
      %1391 = vmatprep.subr.mxu0 0.0
      %1392 = vmatpush2.msra.mxu0 0.0
      %1393 = vmatprep.mubr.f32.mxu0 0.0
      %1394 = vmatmul.mubr.f32.gmra.mxu0 %v1323
      %v1395 = vpop.f32.mrf.mxu0
      %v1396 = vadd.f32 %v1317, %v1395
      %v1397 = vpop.f32.mrf.mxu0
      %v1398 = vadd.f32 %v1319, %v1397
      %1399 = vdwg.mxu0
      %v1400 = vld [vmem:[%s6] sm:$0xff]
      %vm1401 = vcmask 48128
      %v1403 = vsel %vm1401, %v1400, 0
      %v1406 = vsel %vm1213, %v1238, 0
      %v1409 = vsel %vm1213, %v1239, 0
      %1411 = vmatprep.subr.mxu0 0.0
      %1412 = vmatpush1.msra.mxu0 0.0
      %1413 = vmatprep.subr.mxu0 0.0
      %1414 = vmatpush1.msra.mxu0 0.0
      %1415 = vmatprep.subr.mxu0 0.0
      %1416 = vmatpush1.msra.mxu0 0.0
      %1417 = vmatprep.subr.mxu0 0.0
      %1418 = vmatpush1.msra.mxu0 0.0
      %1419 = vmatprep.subr.mxu0 0.0
      %1420 = vmatpush1.msra.mxu0 0.0
      %1421 = vmatprep.subr.mxu0 0.0
      %1422 = vmatpush1.msra.mxu0 0.0
      %1423 = vmatprep.subr.mxu0 0.0
      %1424 = vmatpush1.msra.mxu0 0.0
      %1425 = vmatprep.subr.mxu0 0.0
      %1426 = vmatpush1.msra.mxu0 0.0
      %1427 = vmatprep.subr.mxu0 0.0
      %1428 = vmatpush1.msra.mxu0 0.0
      %1429 = vmatprep.subr.mxu0 0.0
      %1430 = vmatpush1.msra.mxu0 0.0
      %1431 = vmatprep.subr.mxu0 0.0
      %1432 = vmatpush1.msra.mxu0 0.0
      %1433 = vmatprep.subr.mxu0 0.0
      %1434 = vmatpush1.msra.mxu0 0.0
      %1435 = vmatprep.subr.mxu0 0.0
      %1436 = vmatpush1.msra.mxu0 0.0
      %1437 = vmatprep.subr.mxu0 0.0
      %1438 = vmatpush1.msra.mxu0 0.0
      %1439 = vmatprep.subr.mxu0 0.0
      %1440 = vmatpush1.msra.mxu0 0.0
      %1441 = vmatprep.subr.mxu0 %v1409
      %1442 = vmatpush1.msra.mxu0 %v1406
      %1443 = vmatprep.subr.mxu0 0.0
      %1444 = vmatpush2.msra.mxu0 0.0
      %1445 = vmatprep.subr.mxu0 0.0
      %1446 = vmatpush2.msra.mxu0 0.0
      %1447 = vmatprep.subr.mxu0 0.0
      %1448 = vmatpush2.msra.mxu0 0.0
      %1449 = vmatprep.subr.mxu0 0.0
      %1450 = vmatpush2.msra.mxu0 0.0
      %1451 = vmatprep.subr.mxu0 0.0
      %1452 = vmatpush2.msra.mxu0 0.0
      %1453 = vmatprep.subr.mxu0 0.0
      %1454 = vmatpush2.msra.mxu0 0.0
      %1455 = vmatprep.subr.mxu0 0.0
      %1456 = vmatpush2.msra.mxu0 0.0
      %1457 = vmatprep.subr.mxu0 0.0
      %1458 = vmatpush2.msra.mxu0 0.0
      %1459 = vmatprep.subr.mxu0 0.0
      %1460 = vmatpush2.msra.mxu0 0.0
      %1461 = vmatprep.subr.mxu0 0.0
      %1462 = vmatpush2.msra.mxu0 0.0
      %1463 = vmatprep.subr.mxu0 0.0
      %1464 = vmatpush2.msra.mxu0 0.0
      %1465 = vmatprep.subr.mxu0 0.0
      %1466 = vmatpush2.msra.mxu0 0.0
      %1467 = vmatprep.subr.mxu0 0.0
      %1468 = vmatpush2.msra.mxu0 0.0
      %1469 = vmatprep.subr.mxu0 0.0
      %1470 = vmatpush2.msra.mxu0 0.0
      %1471 = vmatprep.subr.mxu0 0.0
      %1472 = vmatpush2.msra.mxu0 0.0
      %1473 = vmatprep.subr.mxu0 0.0
      %1474 = vmatpush2.msra.mxu0 0.0
      %1475 = vmatprep.mubr.f32.mxu0 0.0
      %1476 = vmatmul.mubr.f32.gmra.mxu0 %v1403
      %v1477 = vpop.f32.mrf.mxu0
      %v1478 = vadd.f32 0.0, %v1477
      %v1479 = vpop.f32.mrf.mxu0
      %v1480 = vadd.f32 0.0, %v1479
      %1481 = vdwg.mxu0
      %v1482 = vadd.f32 %v1396, %v1478
      %v1483 = vadd.f32 %v1398, %v1480
      %v1484 = vld [vmem:[%s7] sm:$0xff]
      %v1486 = vcombine.high %v339, %v339
      %v1488 = vsel %vm1242, %v1484, 0
      %v1490 = vsel %vm540, %v339, 0
      %v1492 = vsel %vm540, %v1486, 0
      %1494 = vmatprep.subr.mxu0 0.0
      %1495 = vmatpush1.msra.mxu0 0.0
      %1496 = vmatprep.subr.mxu0 0.0
      %1497 = vmatpush1.msra.mxu0 0.0
      %1498 = vmatprep.subr.mxu0 0.0
      %1499 = vmatpush1.msra.mxu0 0.0
      %1500 = vmatprep.subr.mxu0 0.0
      %1501 = vmatpush1.msra.mxu0 0.0
      %1502 = vmatprep.subr.mxu0 0.0
      %1503 = vmatpush1.msra.mxu0 0.0
      %1504 = vmatprep.subr.mxu0 0.0
      %1505 = vmatpush1.msra.mxu0 0.0
      %1506 = vmatprep.subr.mxu0 0.0
      %1507 = vmatpush1.msra.mxu0 0.0
      %1508 = vmatprep.subr.mxu0 0.0
      %1509 = vmatpush1.msra.mxu0 0.0
      %1510 = vmatprep.subr.mxu0 0.0
      %1511 = vmatpush1.msra.mxu0 0.0
      %1512 = vmatprep.subr.mxu0 0.0
      %1513 = vmatpush1.msra.mxu0 0.0
      %1514 = vmatprep.subr.mxu0 0.0
      %1515 = vmatpush1.msra.mxu0 0.0
      %1516 = vmatprep.subr.mxu0 0.0
      %1517 = vmatpush1.msra.mxu0 0.0
      %1518 = vmatprep.subr.mxu0 0.0
      %1519 = vmatpush1.msra.mxu0 0.0
      %1520 = vmatprep.subr.mxu0 0.0
      %1521 = vmatpush1.msra.mxu0 0.0
      %1522 = vmatprep.subr.mxu0 0.0
      %1523 = vmatpush1.msra.mxu0 0.0
      %1524 = vmatprep.subr.mxu0 %v1492
      %1525 = vmatpush1.msra.mxu0 %v1490
      %1526 = vmatprep.subr.mxu0 0.0
      %1527 = vmatpush2.msra.mxu0 0.0
      %1528 = vmatprep.subr.mxu0 0.0
      %1529 = vmatpush2.msra.mxu0 0.0
      %1530 = vmatprep.subr.mxu0 0.0
      %1531 = vmatpush2.msra.mxu0 0.0
      %1532 = vmatprep.subr.mxu0 0.0
      %1533 = vmatpush2.msra.mxu0 0.0
      %1534 = vmatprep.subr.mxu0 0.0
      %1535 = vmatpush2.msra.mxu0 0.0
      %1536 = vmatprep.subr.mxu0 0.0
      %1537 = vmatpush2.msra.mxu0 0.0
      %1538 = vmatprep.subr.mxu0 0.0
      %1539 = vmatpush2.msra.mxu0 0.0
      %1540 = vmatprep.subr.mxu0 0.0
      %1541 = vmatpush2.msra.mxu0 0.0
      %1542 = vmatprep.subr.mxu0 0.0
      %1543 = vmatpush2.msra.mxu0 0.0
      %1544 = vmatprep.subr.mxu0 0.0
      %1545 = vmatpush2.msra.mxu0 0.0
      %1546 = vmatprep.subr.mxu0 0.0
      %1547 = vmatpush2.msra.mxu0 0.0
      %1548 = vmatprep.subr.mxu0 0.0
      %1549 = vmatpush2.msra.mxu0 0.0
      %1550 = vmatprep.subr.mxu0 0.0
      %1551 = vmatpush2.msra.mxu0 0.0
      %1552 = vmatprep.subr.mxu0 0.0
      %1553 = vmatpush2.msra.mxu0 0.0
      %1554 = vmatprep.subr.mxu0 0.0
      %1555 = vmatpush2.msra.mxu0 0.0
      %1556 = vmatprep.subr.mxu0 0.0
      %1557 = vmatpush2.msra.mxu0 0.0
      %1558 = vmatprep.mubr.f32.mxu0 0.0
      %1559 = vmatmul.mubr.f32.gmra.mxu0 %v1488
      %v1560 = vpop.f32.mrf.mxu0
      %v1561 = vadd.f32 0.0, %v1560
      %v1562 = vpop.f32.mrf.mxu0
      %v1563 = vadd.f32 0.0, %v1562
      %1564 = vdwg.mxu0
      %v1565 = vadd.f32 %v1482, %v1483
      %1566 = vadd.xlane.f32.xlu0 %v1565
      %v1567 = vpop.xlane.xlu0 %1566
      %v1568 = vmul.f32 %v1567, %v624
      %v1569 = vsub.f32 %v1482, %v1568
      %v1570 = vsub.f32 %v1483, %v1568
      %v1571 = vmul.f32 %v1569, %v1569
      %v1572 = vmul.f32 %v1570, %v1570
      %v1573 = vadd.f32 %v1571, %v1572
      %1574 = vadd.xlane.f32.xlu0 %v1573
      %v1575 = vpop.xlane.xlu0 %1574
      %v1576 = vmul.f32 %v1575, %v624
      %v1577 = vadd.f32 %v1576, 1e-05
      %v1578 = vrsqrt.pop %v1577
      %v1579 = vmul.f32 %v1569, %v1578
      %v1580 = vmul.f32 %v1570, %v1578
      %vm1581 = vcmp.ge.f32.partialorder %v1579, 0.0
      %vm1582 = vcmp.ge.f32.partialorder %v1580, 0.0
      %v1583 = vmul.f32 %v1579, 0.1
      %v1584 = vmul.f32 %v1580, 0.1
      %v1585 = vsel %vm1581, %v1579, %v1583
      %v1586 = vsel %vm1582, %v1580, %v1584
      %v1587 = vadd.f32 %v1561, %v1563
      %1588 = vadd.xlane.f32.xlu0 %v1587
      %v1589 = vpop.xlane.xlu0 %1588
      %v1590 = vmul.f32 %v1589, %v624
      %v1591 = vsub.f32 %v1561, %v1590
      %v1592 = vsub.f32 %v1563, %v1590
      %v1593 = vmul.f32 %v1591, %v1591
      %v1594 = vmul.f32 %v1592, %v1592
      %v1595 = vadd.f32 %v1593, %v1594
      %1596 = vadd.xlane.f32.xlu0 %v1595
      %v1597 = vpop.xlane.xlu0 %1596
      %v1598 = vmul.f32 %v1597, %v624
      %v1599 = vadd.f32 %v1598, 1e-05
      %v1600 = vrsqrt.pop %v1599
      %v1601 = vmul.f32 %v1591, %v1600
      %v1602 = vmul.f32 %v1592, %v1600
      %vm1603 = vcmp.ge.f32.partialorder %v1601, 0.0
      %vm1604 = vcmp.ge.f32.partialorder %v1602, 0.0
      %v1605 = vmul.f32 %v1601, 0.1
      %v1606 = vmul.f32 %v1602, 0.1
      %v1607 = vsel %vm1603, %v1601, %v1605
      %v1608 = vsel %vm1604, %v1602, %v1606
      %v1609 = vadd.f32 %v1585, %v1607
      %v1610 = vadd.f32 %v1586, %v1608
      %1611 = vst [vmem:[%s305] sm:$0xff] %v1609
      %1612 = vst [vmem:[%s305 + $0x8] sm:$0xff] %v1610
      %p1613 = scmp.lt.s32.totalorder %s19, 1
      %s1614 = scalar_select %p1613, %s19, 1
      %s1615 = smul.addr %s1614, 2
      %s1616 = smul.addr %s1615, 8
      %s1617 = scalar_lea.vmem %s8, %s1616
      // Predicated region
      $region53: #{rb2_forward.1} parent=51 // pred_check
        %p1618 = pneg %p210
      $region54: #{rb2_forward.1} parent=51 // pred_check_branch
        %1620 = sbr.rel (%p1618) target = $region56
      $region55: #{rb2_forward.1} parent=51 // pred_region
        _
      $region56: #{rb2_forward.1} parent=51 // pred_fallthru
        _
    $region52: #{rb2_forward.1} parent=5 // pred_fallthru
      _
    %p1621 = scmp.le.s32.totalorder 2, %s14
    // Predicated region
    $region57: #{rb2_forward.1} parent=5 // pred_check
      %p1622 = pneg %p1621
    $region58: #{rb2_forward.1} parent=5 // pred_check_branch
      %1624 = sbr.rel (%p1622) target = $region60
    $region59: #{rb2_forward.1} parent=5 // pred_region
      %s1625 = ssub.s32 %s14, 2
      // Predicated region
      $region61: #{rb2_forward.1} parent=59 // pred_check
        %p1626 = pneg %p216
      $region62: #{rb2_forward.1} parent=59 // pred_check_branch
        %1628 = sbr.rel (%p1626) target = $region64
      $region63: #{rb2_forward.1} parent=59 // pred_region
        %p1629 = scmp.lt.s32.totalorder %s20, 1
        %s1630 = scalar_select %p1629, %s20, 1
        %s1631 = smul.addr %s1630, 2
        %s1632 = smul.addr %s1631, 8
        %s1633 = scalar_lea.vmem %s8, %s1632
      $region64: #{rb2_forward.1} parent=59 // pred_fallthru
        _
    $region60: #{rb2_forward.1} parent=5 // pred_fallthru
      _
  $region6: #{rb2_forward.1} parent=0 // loop_footer
    %s18 = sadd.s32 1, %s14
  $region7: #{rb2_forward.1} parent=0 // loop_footer_branch
    %13 = sbr.rel target = $region3
  $region8: #{rb2_forward.1} parent=0 // loop_exit
    _

</llo_original>
